<compile_context>
chip_gen: v7x
topology: tpu7x:2x2x1
jax: 0.10.0
libtpu: 0.0.40
codegen_flags: <defaults>
</compile_context>

<pallas_src>
import functools
import math

import jax
import jax.numpy as jnp
from jax.experimental import pallas as pl
from jax.experimental.pallas import tpu as pltpu

F32 = jnp.float32
BF16 = jnp.bfloat16
BN_EPS = 1e-5
LN_EPS = 1e-5
VMEM_LIMIT = 32 * 1024 * 1024     # safe on v5e/v6e (128 MiB) and v7x (64 MiB)


def _round_up(x, m):
    return ((x + m - 1) // m) * m


# --------------------------------------------------------------------------
# Row-tiled GEMM with fused bias / residual / activation epilogue
# --------------------------------------------------------------------------
def _linear_kernel(has_bias, has_res, activation, *refs):
    # refs = (a, w, [bias], [res], out); epilogue order: bias -> residual -> activation
    a_ref, w_ref = refs[0], refs[1]
    y = jnp.dot(a_ref[...], w_ref[...], preferred_element_type=jnp.float32)
    idx = 2
    if has_bias:
        y = y + refs[idx][...].astype(jnp.float32)
        idx += 1
    if has_res:
        y = y + refs[idx][...].astype(jnp.float32)
        idx += 1
    if activation == "gelu":
        y = jax.nn.gelu(y, approximate=False)        # exact (erf) GELU, nn.GELU default
    elif activation == "relu":
        y = jnp.maximum(y, 0.0)
    out_ref = refs[-1]
    out_ref[...] = y.astype(out_ref.dtype)


@functools.partial(jax.jit, static_argnames=("activation", "out_dtype"))
def pallas_linear(a, w, bias=None, residual=None, activation=None, out_dtype=F32):
    """y = act((a @ w + bias) + residual), rows tiled over the grid."""
    M, K = a.shape
    N = w.shape[1]
    # ~2 MiB A-tile budget -> large tiles for small-K GEMMs, clamped for huge K (input layer).
    row_bytes = K * jnp.dtype(a.dtype).itemsize
    budget = max(8, min(1024, ((2 * 1024 * 1024) // max(row_bytes, 1)) // 8 * 8))
    tm = min(_round_up(M, 8), budget)
    Mp = _round_up(M, tm)
    if Mp != M:
        a = jnp.pad(a, ((0, Mp - M), (0, 0)))
        if residual is not None:
            residual = jnp.pad(residual, ((0, Mp - M), (0, 0)))

    operands = [a, w]
    in_specs = [pl.BlockSpec((tm, K), lambda i: (i, 0)),
                pl.BlockSpec((K, N), lambda i: (0, 0))]
    if bias is not None:
        operands.append(bias.reshape(1, N).astype(F32))
        in_specs.append(pl.BlockSpec((1, N), lambda i: (0, 0)))
    if residual is not None:
        operands.append(residual)
        in_specs.append(pl.BlockSpec((tm, N), lambda i: (i, 0)))

    kernel = functools.partial(_linear_kernel, bias is not None,
                               residual is not None, activation)
    out = pl.pallas_call(
        kernel,
        out_shape=jax.ShapeDtypeStruct((Mp, N), out_dtype),
        grid=(Mp // tm,),
        in_specs=in_specs,
        out_specs=pl.BlockSpec((tm, N), lambda i: (i, 0)),
        compiler_params=pltpu.CompilerParams(
            dimension_semantics=("parallel",),
            vmem_limit_bytes=VMEM_LIMIT),
    )(*operands)
    return out[:M]


# --------------------------------------------------------------------------
# 3x3 stride-1 conv + folded BN (+ residual + ReLU), no im2col materialization
# --------------------------------------------------------------------------
def _conv3x3_s1_kernel(Wp, n_out, relu, has_res, *refs):
    # refs = (x (R, Cin), w (9, Cin, Cout), shift (1, Cout), [res (n_out, Cout)], out (n_out, Cout))
    # Flat-offset trick: output flat row p (= y*Wp + x') needs input flat rows p + i*Wp + j.
    x_ref, w_ref, b_ref = refs[0], refs[1], refs[2]
    res_ref = refs[3] if has_res else None
    o_ref = refs[-1]
    acc = None
    for t in range(9):
        i, j = divmod(t, 3)
        xs = x_ref[pl.ds(i * Wp + j, n_out), :]                      # (n_out, Cin) bf16
        part = jnp.dot(xs, w_ref[t], preferred_element_type=jnp.float32)
        acc = part if acc is None else acc + part
    y = acc + b_ref[...]                                             # BN shift as bias
    if has_res:
        y = y + res_ref[...].astype(jnp.float32)
    if relu:
        y = jnp.maximum(y, 0.0)
    o_ref[...] = y.astype(o_ref.dtype)


@functools.partial(jax.jit, static_argnames=("relu",))
def conv3x3_s1_bn(x, w, scale, shift, residual=None, relu=True):
    """3x3 / stride 1 / pad 1 conv with BN folded (w*scale, bias=shift), fused residual+ReLU.

    Tap accumulation happens in-kernel over a flattened padded image (one image per grid step),
    so no 9x im2col patches array ever touches HBM."""
    x = x.astype(BF16)
    B, H, W, Cin = x.shape
    Cout = w.shape[-1]
    Wp = W + 2
    R = (H + 3) * Wp                      # pad: 1 top, 2 bottom, 1 left, 1 right (flat-trick slack)
    n_out = H * Wp                        # output in padded-width coords (junk cols sliced later)
    xp = jnp.pad(x, ((0, 0), (1, 2), (1, 1), (0, 0))).reshape(B, R, Cin)
    wf = (w * scale.reshape(1, 1, 1, Cout)).reshape(9, Cin, Cout).astype(BF16)

    operands = [xp, wf, shift.reshape(1, Cout).astype(F32)]
    in_specs = [pl.BlockSpec((None, R, Cin), lambda b: (b, 0, 0)),
                pl.BlockSpec((9, Cin, Cout), lambda b: (0, 0, 0)),
                pl.BlockSpec((1, Cout), lambda b: (0, 0))]
    if residual is not None:
        resp = jnp.pad(residual.astype(BF16),
                       ((0, 0), (0, 0), (0, Wp - W), (0, 0))).reshape(B, n_out, Cout)
        operands.append(resp)
        in_specs.append(pl.BlockSpec((None, n_out, Cout), lambda b: (b, 0, 0)))

    kernel = functools.partial(_conv3x3_s1_kernel, Wp, n_out, relu, residual is not None)
    out = pl.pallas_call(
        kernel,
        out_shape=jax.ShapeDtypeStruct((B, n_out, Cout), BF16),
        grid=(B,),
        in_specs=in_specs,
        out_specs=pl.BlockSpec((None, n_out, Cout), lambda b: (b, 0, 0)),
        compiler_params=pltpu.CompilerParams(
            dimension_semantics=("parallel",),
            vmem_limit_bytes=VMEM_LIMIT),
    )(*operands)
    # drop the 2 junk columns that come from computing in padded-width coordinates
    return out.reshape(B, H, Wp, Cout)[:, :, :W, :]


# --------------------------------------------------------------------------
# Remaining conv flavours (stem 7x7 s2, stride-2 3x3, 1x1 downsample) — BN folded
# --------------------------------------------------------------------------
@functools.partial(jax.jit, static_argnames=("stride", "padding", "relu"))
def conv_im2col_bn(x, w, scale, shift, stride, padding, relu=True):
    """General conv via im2col + fused GEMM (used only for the strided convs)."""
    # TODO(synk): stride-2 convs could also avoid im2col via a parity (space-to-batch) split.
    x = x.astype(BF16)
    B, H, W, Cin = x.shape
    kh, kw, _, Cout = w.shape
    if padding:
        x = jnp.pad(x, ((0, 0), (padding, padding), (padding, padding), (0, 0)))
    Hp, Wp = H + 2 * padding, W + 2 * padding
    OH = (Hp - kh) // stride + 1
    OW = (Wp - kw) // stride + 1
    cols = []
    for i in range(kh):
        for j in range(kw):
            cols.append(x[:, i:i + stride * (OH - 1) + 1:stride,
                          j:j + stride * (OW - 1) + 1:stride, :])
    patches = jnp.concatenate(cols, axis=-1).reshape(B * OH * OW, kh * kw * Cin)
    wf = (w * scale.reshape(1, 1, 1, Cout)).reshape(kh * kw * Cin, Cout).astype(BF16)
    out = pallas_linear(patches, wf, bias=shift,
                        activation="relu" if relu else None, out_dtype=BF16)
    return out.reshape(B, OH, OW, Cout)


@jax.jit
def conv1x1_s2_bn(x, w, scale, shift):
    """1x1 stride-2 downsample conv + folded BN (no activation)."""
    x = x.astype(BF16)
    Cin, Cout = w.shape[2], w.shape[3]
    xs = x[:, ::2, ::2, :]
    B, OH, OW, _ = xs.shape
    wf = (w.reshape(Cin, Cout) * scale.reshape(1, Cout)).astype(BF16)
    out = pallas_linear(xs.reshape(B * OH * OW, Cin), wf, bias=shift, out_dtype=BF16)
    return out.reshape(B, OH, OW, Cout)


def maxpool_3x3_s2(x):
    # cheap relative to the conv GEMMs; kept as XLA glue
    B, H, W, C = x.shape
    xp = jnp.pad(x, ((0, 0), (1, 1), (1, 1), (0, 0)), constant_values=-jnp.inf)
    OH = (H + 2 - 3) // 2 + 1
    OW = (W + 2 - 3) // 2 + 1
    out = None
    for i in range(3):
        for j in range(3):
            sl = xp[:, i:i + 2 * (OH - 1) + 1:2, j:j + 2 * (OW - 1) + 1:2, :]
            out = sl if out is None else jnp.maximum(out, sl)
    return out


# --------------------------------------------------------------------------
# Fused ViT kernels (tiny shapes -> one VMEM-resident kernel per stage)
# --------------------------------------------------------------------------
def _ln_linear_kernel(eps, x_ref, g_ref, b_ref, w_ref, bias_ref, o_ref):
    x = x_ref[...].astype(jnp.float32)
    mu = jnp.mean(x, axis=-1, keepdims=True)
    var = jnp.mean(jnp.square(x - mu), axis=-1, keepdims=True)
    h = (x - mu) * jax.lax.rsqrt(var + eps) * g_ref[...] + b_ref[...]
    o_ref[...] = (jnp.dot(h, w_ref[...], preferred_element_type=jnp.float32)
                  + bias_ref[...]).astype(o_ref.dtype)


@functools.partial(jax.jit, static_argnames=("eps",))
def pallas_ln_linear(x, gamma, beta, w, bias, eps=LN_EPS):
    """Fused LayerNorm + Linear (used for LN1->QKV and for the classification head)."""
    M, E = x.shape
    N = w.shape[1]
    return pl.pallas_call(
        functools.partial(_ln_linear_kernel, eps),
        out_shape=jax.ShapeDtypeStruct((M, N), F32),
    )(x, gamma.reshape(1, E), beta.reshape(1, E), w, bias.reshape(1, N))


def _attention_kernel(scale, q_ref, k_ref, v_ref, o_ref):
    q, k, v = q_ref[...], k_ref[...], v_ref[...]
    s = jnp.einsum("bqd,bkd->bqk", q, k, preferred_element_type=jnp.float32) * scale
    m = jnp.max(s, axis=-1, keepdims=True)
    p = jnp.exp(s - m)
    p = p / jnp.sum(p, axis=-1, keepdims=True)
    o_ref[...] = jnp.einsum("bqk,bkd->bqd", p, v, preferred_element_type=jnp.float32)


@functools.partial(jax.jit, static_argnames=("scale",))
def pallas_attention(q, k, v, scale):
    # q, k, v: (B*num_heads, S, head_dim); full softmax is fine at S = num_patches + 1.
    return pl.pallas_call(
        functools.partial(_attention_kernel, scale),
        out_shape=jax.ShapeDtypeStruct(q.shape, F32),
    )(q, k, v)


def _attn_tail_kernel(eps, attn_ref, wo_ref, bo_ref, x_ref, g2_ref, b2_ref,
                      w1_ref, b1_ref, w2_ref, b2b_ref, o_ref):
    # y = x + out_proj(attn);  out = y + W2(gelu(W1(LN2(y)) + b1)) + b2
    x = x_ref[...]
    y = (jnp.dot(attn_ref[...], wo_ref[...], preferred_element_type=jnp.float32)
         + bo_ref[...] + x)
    mu = jnp.mean(y, axis=-1, keepdims=True)
    var = jnp.mean(jnp.square(y - mu), axis=-1, keepdims=True)
    h = (y - mu) * jax.lax.rsqrt(var + eps) * g2_ref[...] + b2_ref[...]
    m = jax.nn.gelu(jnp.dot(h, w1_ref[...], preferred_element_type=jnp.float32)
                    + b1_ref[...], approximate=False)
    o_ref[...] = (y + jnp.dot(m, w2_ref[...], preferred_element_type=jnp.float32)
                  + b2b_ref[...]).astype(o_ref.dtype)


@functools.partial(jax.jit, static_argnames=("eps",))
def pallas_attn_tail(attn, x, wo, bo, g2, b2, w1, b1, w2, b2b, eps=LN_EPS):
    M, E = x.shape
    H = w1.shape[1]
    return pl.pallas_call(
        functools.partial(_attn_tail_kernel, eps),
        out_shape=jax.ShapeDtypeStruct((M, E), F32),
    )(attn, wo, bo.reshape(1, E), x, g2.reshape(1, E), b2.reshape(1, E),
      w1, b1.reshape(1, H), w2, b2b.reshape(1, E))


# --------------------------------------------------------------------------
# Parameter initialization (deterministic, synthetic)
# --------------------------------------------------------------------------
class ParamGen:
    def __init__(self, seed):
        self._key = jax.random.PRNGKey(seed)
        self._i = 0

    def normal(self, shape, scale):
        self._i += 1
        return scale * jax.random.normal(jax.random.fold_in(self._key, self._i), shape, F32)


def make_bn(gen, c):
    gamma = 1.0 + gen.normal((c,), 0.05)
    beta = gen.normal((c,), 0.05)
    running_mean = jnp.zeros((c,), F32)
    running_var = jnp.ones((c,), F32)
    scale = gamma / jnp.sqrt(running_var + BN_EPS)
    shift = beta - running_mean * scale
    return scale, shift


def make_conv(gen, kh, kw, cin, cout):
    return gen.normal((kh, kw, cin, cout), math.sqrt(2.0 / (kh * kw * cin)))


RESNET_STAGES = [(64, 64, 1), (64, 128, 2), (128, 256, 2), (256, 512, 2)]


def init_resnet18(gen):
    p = {"conv1_w": make_conv(gen, 7, 7, 3, 64), "bn1": make_bn(gen, 64), "stages": []}
    for cin, cout, stride in RESNET_STAGES:
        blocks = []
        for b in range(2):
            s = stride if b == 0 else 1
            bc_in = cin if b == 0 else cout
            blk = {"w1": make_conv(gen, 3, 3, bc_in, cout), "bn1": make_bn(gen, cout),
                   "w2": make_conv(gen, 3, 3, cout, cout), "bn2": make_bn(gen, cout)}
            if s != 1 or bc_in != cout:
                blk["wd"] = make_conv(gen, 1, 1, bc_in, cout)
                blk["bnd"] = make_bn(gen, cout)
            blocks.append(blk)
        p["stages"].append(blocks)
    return p


def init_vit(gen, embed_dim, hidden_dim, num_layers, num_classes, num_patches, flat_dim):
    p = {
        "input_w": gen.normal((flat_dim, embed_dim), 1.0 / math.sqrt(flat_dim)),
        "input_b": gen.normal((embed_dim,), 0.02),
        "cls_token": gen.normal((1, 1, embed_dim), 1.0),           # ~ torch.randn
        "pos_embedding": gen.normal((1, 1 + num_patches, embed_dim), 1.0),
        "layers": [],
        "head_ln_g": 1.0 + gen.normal((embed_dim,), 0.02),
        "head_ln_b": gen.normal((embed_dim,), 0.02),
        "head_w": gen.normal((embed_dim, num_classes), 1.0 / math.sqrt(embed_dim)),
        "head_b": gen.normal((num_classes,), 0.02),
    }
    for _ in range(num_layers):
        p["layers"].append({
            "ln1_g": 1.0 + gen.normal((embed_dim,), 0.02),
            "ln1_b": gen.normal((embed_dim,), 0.02),
            "w_in": gen.normal((embed_dim, 3 * embed_dim), 1.0 / math.sqrt(embed_dim)),
            "b_in": gen.normal((3 * embed_dim,), 0.02),
            "w_out": gen.normal((embed_dim, embed_dim), 1.0 / math.sqrt(embed_dim)),
            "b_out": gen.normal((embed_dim,), 0.02),
            "ln2_g": 1.0 + gen.normal((embed_dim,), 0.02),
            "ln2_b": gen.normal((embed_dim,), 0.02),
            "w1": gen.normal((embed_dim, hidden_dim), 1.0 / math.sqrt(embed_dim)),
            "b1": gen.normal((hidden_dim,), 0.02),
            "w2": gen.normal((hidden_dim, embed_dim), 1.0 / math.sqrt(hidden_dim)),
            "b2": gen.normal((embed_dim,), 0.02),
        })
    return p


# --------------------------------------------------------------------------
# Model forward (glue orchestration around Pallas kernels)
# --------------------------------------------------------------------------
def basic_block(x, blk, stride):
    identity = x
    s1, sh1 = blk["bn1"]
    s2, sh2 = blk["bn2"]
    if stride == 1:
        out = conv3x3_s1_bn(x, blk["w1"], s1, sh1, relu=True)
    else:
        out = conv_im2col_bn(x, blk["w1"], s1, sh1, stride=stride, padding=1, relu=True)
    if "wd" in blk:
        sd, shd = blk["bnd"]
        identity = conv1x1_s2_bn(identity, blk["wd"], sd, shd)
    # conv2 + bn2 + residual add + final ReLU all happen in one fused kernel epilogue
    return conv3x3_s1_bn(out, blk["w2"], s2, sh2, residual=identity, relu=True)


def resnet18_features(x_nhwc, p):
    """ResNet18 trunk (children()[:-2]): conv1/bn/relu/maxpool + layer1..4 -> (B, 7, 7, 512)."""
    s, sh = p["bn1"]
    x = conv_im2col_bn(x_nhwc, p["conv1_w"], s, sh, stride=2, padding=3, relu=True)
    x = maxpool_3x3_s2(x)
    for stage_idx, (_, _, stride) in enumerate(RESNET_STAGES):
        for b, blk in enumerate(p["stages"][stage_idx]):
            x = basic_block(x, blk, stride if b == 0 else 1)
    return x


def attention_block_fwd(x2, lp, batch, seq, num_heads):
    """Pre-LN transformer block (nn.MultiheadAttention semantics); x2: (batch*seq, E) rows."""
    E = x2.shape[-1]
    D = E // num_heads
    qkv = pallas_ln_linear(x2, lp["ln1_g"], lp["ln1_b"], lp["w_in"], lp["b_in"])   # (B*S, 3E)
    qkv = qkv.reshape(batch, seq, 3, num_heads, D)
    qkv = jnp.transpose(qkv, (2, 0, 3, 1, 4)).reshape(3, batch * num_heads, seq, D)
    attn = pallas_attention(qkv[0], qkv[1], qkv[2], 1.0 / math.sqrt(D))            # (B*H, S, D)
    attn = jnp.transpose(attn.reshape(batch, num_heads, seq, D),
                         (0, 2, 1, 3)).reshape(batch * seq, E)
    # out-proj + residual + LN2 + MLP + residual fused in one kernel
    return pallas_attn_tail(attn, x2, lp["w_out"], lp["b_out"], lp["ln2_g"], lp["ln2_b"],
                            lp["w1"], lp["b1"], lp["w2"], lp["b2"])


def vision_transformer_embedded_forward(x, resnet_params, vit_params, num_heads):
    """x: (B, num_patches, 3, 224, 224), NCHW per-patch images (PyTorch convention)."""
    B, T = x.shape[0], x.shape[1]
    x = x.astype(BF16)
    feats = []
    for i in range(T):
        xi = jnp.transpose(x[:, i], (0, 2, 3, 1))                      # NCHW -> NHWC
        fi = resnet18_features(xi, resnet_params[i])                   # (B, 7, 7, 512) bf16
        # flatten in torch (C, H, W) order -> 25088 features
        fi = jnp.transpose(fi, (0, 3, 1, 2)).reshape(B, -1)
        feats.append(fi)
    tokens = jnp.stack(feats, axis=1)                                  # (B, T, 25088) bf16

    emb = pallas_linear(tokens.reshape(B * T, -1),
                        vit_params["input_w"].astype(BF16), vit_params["input_b"],
                        out_dtype=F32).reshape(B, T, -1)
    E = emb.shape[-1]
    cls = jnp.broadcast_to(vit_params["cls_token"], (B, 1, E))
    h = jnp.concatenate([cls, emb], axis=1) + vit_params["pos_embedding"][:, :T + 1]
    # dropout(p=0.0) -> identity
    seq = T + 1
    h2 = h.reshape(B * seq, E)                                         # batch-major token rows
    for lp in vit_params["layers"]:
        h2 = attention_block_fwd(h2, lp, B, seq, num_heads)
    cls_out = h2.reshape(B, seq, E)[:, 0, :]                           # (B, E)
    return pallas_ln_linear(cls_out, vit_params["head_ln_g"], vit_params["head_ln_b"],
                            vit_params["head_w"], vit_params["head_b"])


# --------------------------------------------------------------------------
if __name__ == "__main__":
    B = 2                 # hparams['batch_size']
    NUM_PATCHES = 2
    EMBED_DIM = 32
    HIDDEN_DIM = 64
    NUM_HEADS = 4
    NUM_LAYERS = 2
    NUM_CLASSES = 10
    IMG = 224             # required so the ResNet trunk yields (512, 7, 7) -> flattened_dim 25088
    FLAT_DIM = 512 * 7 * 7

    gen = ParamGen(0)
    resnet_params = [init_resnet18(gen) for _ in range(NUM_PATCHES)]
    vit_params = init_vit(gen, EMBED_DIM, HIDDEN_DIM, NUM_LAYERS, NUM_CLASSES,
                          NUM_PATCHES, FLAT_DIM)

    x = jax.random.normal(jax.random.PRNGKey(0), (B, NUM_PATCHES, 3, IMG, IMG), F32)

    out = vision_transformer_embedded_forward(x, resnet_params, vit_params, NUM_HEADS)
    out = jax.block_until_ready(out)
    assert out.shape == (B, NUM_CLASSES), out.shape
    assert bool(jnp.all(jnp.isfinite(out)))
    print("KERNEL_OK")
</pallas_src>

<mosaic_0001>
module attributes {stable_mosaic.version = 11 : i64} {
  func.func @_linear_kernel(%arg0: i32, %arg1: memref<1024x147xbf16, #tpu.memory_space<vmem>>, %arg2: memref<147x64xbf16, #tpu.memory_space<vmem>>, %arg3: memref<1x64xf32, #tpu.memory_space<vmem>>, %arg4: memref<1024x64xbf16, #tpu.memory_space<vmem>>) attributes {dimension_semantics = [#tpu.dimension_semantics<parallel>], iteration_bounds = array<i64: 25>, scalar_prefetch = 0 : i64, scratch_operands = 0 : i64, tpu.core_type = #tpu.core_type<tc>, window_params = [{transform_indices = @transform_0, window_bounds = array<i64: 1024, 147>}, {pipeline_mode = #tpu.pipeline_mode<synchronous>, transform_indices = @transform_1, window_bounds = array<i64: 147, 64>}, {pipeline_mode = #tpu.pipeline_mode<synchronous>, transform_indices = @transform_2, window_bounds = array<i64: 1, 64>}, {transform_indices = @transform_3, window_bounds = array<i64: 1024, 64>}]} {
    %c0 = arith.constant 0 : index
    %c0_0 = arith.constant 0 : index
    %0 = vector.load %arg1[%c0, %c0_0] : memref<1024x147xbf16, #tpu.memory_space<vmem>>, vector<1024x147xbf16>
    %c0_1 = arith.constant 0 : index
    %c0_2 = arith.constant 0 : index
    %1 = vector.load %arg2[%c0_1, %c0_2] : memref<147x64xbf16, #tpu.memory_space<vmem>>, vector<147x64xbf16>
    %cst = arith.constant dense<0.000000e+00> : vector<1024x64xf32>
    %2 = tpu.matmul %0, %1, %cst {dimension_numbers = #tpu.dot_dimension_numbers<[1], [0], [0], [1], [0, 0, 1, 1], [], []>} : vector<1024x147xbf16>, vector<147x64xbf16>, vector<1024x64xf32> -> vector<1024x64xf32>
    %c0_3 = arith.constant 0 : index
    %c0_4 = arith.constant 0 : index
    %3 = vector.load %arg3[%c0_3, %c0_4] : memref<1x64xf32, #tpu.memory_space<vmem>>, vector<1x64xf32>
    %4 = vector.broadcast %3 : vector<1x64xf32> to vector<1024x64xf32>
    %5 = arith.addf %2, %4 : vector<1024x64xf32>
    %cst_5 = arith.constant 0.000000e+00 : f32
    %6 = vector.broadcast %cst_5 : f32 to vector<1024x64xf32>
    %7 = arith.maximumf %5, %6 : vector<1024x64xf32>
    %8 = arith.truncf %7 : vector<1024x64xf32> to vector<1024x64xbf16>
    %c0_6 = arith.constant 0 : index
    %c0_7 = arith.constant 0 : index
    %9 = vector.load %arg4[%c0_6, %c0_7] : memref<1024x64xbf16, #tpu.memory_space<vmem>>, vector<1024x64xbf16>
    tpu.vector_store %arg4[%c0_6, %c0_7], %8 {strides = array<i32>} : memref<1024x64xbf16, #tpu.memory_space<vmem>>, vector<1024x64xbf16>,
    return
  }
  func.func @transform_0(%arg0: i32) -> (i32, i32) {
    %c0_i32 = arith.constant 0 : i32
    %c0_i32_0 = arith.constant 0 : i32
    return %arg0, %c0_i32 : i32, i32
  }
  func.func @transform_1(%arg0: i32) -> (i32, i32) {
    %c0_i32 = arith.constant 0 : i32
    %c0_i32_0 = arith.constant 0 : i32
    %c0_i32_1 = arith.constant 0 : i32
    return %c0_i32, %c0_i32_0 : i32, i32
  }
  func.func @transform_2(%arg0: i32) -> (i32, i32) {
    %c0_i32 = arith.constant 0 : i32
    %c0_i32_0 = arith.constant 0 : i32
    %c0_i32_1 = arith.constant 0 : i32
    return %c0_i32, %c0_i32_0 : i32, i32
  }
  func.func @transform_3(%arg0: i32) -> (i32, i32) {
    %c0_i32 = arith.constant 0 : i32
    %c0_i32_0 = arith.constant 0 : i32
    return %arg0, %c0_i32 : i32, i32
  }
}

</mosaic_0001>

<llo_original>
// kernel: pallas_linear.1
$region0: #{pallas_linear.1}
  #allocation0 [shape = 'u32[]', space=smem, size = 0x4, offset = 0x4, fixed_abs, tag = 'smem constant byte address 0x4 - core index']
  #allocation1 [shape = 'u32[144,128]{1,0:T(1,128)}', space=vmem, size = 0x12000, scoped, tag = 'internal scratch']
  %s0 = inlined_call_operand.vmem [shape: bf16[25600,147], index: 0, kind: input, shape index: {}]
  %s1 = inlined_call_operand.vmem [shape: bf16[147,64], index: 1, kind: input, shape index: {}]
  %s2 = inlined_call_operand.vmem [shape: f32[1,64], index: 2, kind: input, shape index: {}]
  %s3 = inlined_call_operand.vmem [shape: bf16[25600,64], index: 3, kind: output, shape index: {}]
  %s4 = sld [smem:[#allocation0]]
  $region45: #{pallas_linear.1} parent=0
    _
  %s6 = ssub.s32 1, %s4
  %s7 = scalar_select 0, %s6, %s4
  loop: start=0, step=1, limit=27
  $region2: #{pallas_linear.1} parent=0 // loop_pre_header
    _
  $region3: #{pallas_linear.1} parent=0 // loop_header
    %s9 = sphi 0, %s13
    %p10 = scmp.ge.s32.totalorder %s9, 27
    %s19 = sphi 0, %s21
    %s22 = sphi 0, %s19
    %s23 = sphi 0, %s22
    %s39 = sphi 0, %s23
    %s43 = sphi 0, %s43
    %s45 = sphi 0, %s43
    %s46 = sphi 0, %s45
    %s60 = sphi 0, %s46
    %s64 = sphi 0, %s64
    %s66 = sphi 0, %s64
    %s67 = sphi 0, %s66
    %s81 = sphi 0, %s67
    %s87 = sphi 0, %s89
    %s90 = sphi 0, %s87
    %s91 = sphi 0, %s90
    %s107 = sphi 0, %s91
  $region4: #{pallas_linear.1} parent=0 // loop_header_branch
    %12 = sbr.rel (%p10) target = $region8
  $region5: #{pallas_linear.1} parent=0 // loop_body
    %s14 = ssub.s32 %s9, 1
    %s15 = ssub.s32 %s9, 2
    %s16 = sadd.s32 %s9, 1
    %s17 = ssub.s32 %s9, %s16
    %p18 = scmp.eq.s32.totalorder %s17, 0
    %s20 = sadd.s32 %s19, 1
    %s21 = scalar_select %p18, %s19, %s20
    %p24 = pneg %p18
    %p25 = scmp.eq.s32.totalorder %s9, 24
    %p26 = por %p24, %p25
    %p27 = scmp.ne.s32.totalorder %s19, %s22
    %p28 = scmp.eq.s32.totalorder %s9, 0
    %p29 = por %p27, %p28
    %p30 = scmp.ne.s32.totalorder %s19, %s22
    %p31 = scmp.eq.s32.totalorder %s14, 24
    %p32 = por %p30, %p31
    %p33 = scmp.ne.s32.totalorder %s22, %s23
    %p34 = scmp.eq.s32.totalorder %s14, 0
    %p35 = por %p33, %p34
    %p36 = scmp.ne.s32.totalorder %s22, %s23
    %p37 = scmp.eq.s32.totalorder %s15, 24
    %p38 = por %p36, %p37
    %p40 = scmp.ne.s32.totalorder %s23, %s39
    %p41 = scmp.eq.s32.totalorder %s15, 0
    %p42 = por %p40, %p41
    %s44 = sadd.s32 %s43, 1
    %p47 = scmp.eq.s32.totalorder %s9, 24
    %p48 = scmp.ne.s32.totalorder %s43, %s45
    %p49 = scmp.eq.s32.totalorder %s9, 0
    %p50 = por %p48, %p49
    %p51 = scmp.ne.s32.totalorder %s43, %s45
    %p52 = scmp.eq.s32.totalorder %s14, 24
    %p53 = por %p51, %p52
    %p54 = scmp.ne.s32.totalorder %s45, %s46
    %p55 = scmp.eq.s32.totalorder %s14, 0
    %p56 = por %p54, %p55
    %p57 = scmp.ne.s32.totalorder %s45, %s46
    %p58 = scmp.eq.s32.totalorder %s15, 24
    %p59 = por %p57, %p58
    %p61 = scmp.ne.s32.totalorder %s46, %s60
    %p62 = scmp.eq.s32.totalorder %s15, 0
    %p63 = por %p61, %p62
    %s65 = sadd.s32 %s64, 1
    %p68 = scmp.eq.s32.totalorder %s9, 24
    %p69 = scmp.ne.s32.totalorder %s64, %s66
    %p70 = scmp.eq.s32.totalorder %s9, 0
    %p71 = por %p69, %p70
    %p72 = scmp.ne.s32.totalorder %s64, %s66
    %p73 = scmp.eq.s32.totalorder %s14, 24
    %p74 = por %p72, %p73
    %p75 = scmp.ne.s32.totalorder %s66, %s67
    %p76 = scmp.eq.s32.totalorder %s14, 0
    %p77 = por %p75, %p76
    %p78 = scmp.ne.s32.totalorder %s66, %s67
    %p79 = scmp.eq.s32.totalorder %s15, 24
    %p80 = por %p78, %p79
    %p82 = scmp.ne.s32.totalorder %s67, %s81
    %p83 = scmp.eq.s32.totalorder %s15, 0
    %p84 = por %p82, %p83
    %s85 = ssub.s32 %s9, %s16
    %p86 = scmp.eq.s32.totalorder %s85, 0
    %s88 = sadd.s32 %s87, 1
    %s89 = scalar_select %p86, %s87, %s88
    %p92 = pneg %p86
    %p93 = scmp.eq.s32.totalorder %s9, 24
    %p94 = por %p92, %p93
    %p95 = scmp.ne.s32.totalorder %s87, %s90
    %p96 = scmp.eq.s32.totalorder %s9, 0
    %p97 = por %p95, %p96
    %p98 = scmp.ne.s32.totalorder %s87, %s90
    %p99 = scmp.eq.s32.totalorder %s14, 24
    %p100 = por %p98, %p99
    %p101 = scmp.ne.s32.totalorder %s90, %s91
    %p102 = scmp.eq.s32.totalorder %s14, 0
    %p103 = por %p101, %p102
    %p104 = scmp.ne.s32.totalorder %s90, %s91
    %p105 = scmp.eq.s32.totalorder %s15, 24
    %p106 = por %p104, %p105
    %p108 = scmp.ne.s32.totalorder %s91, %s107
    %p109 = scmp.eq.s32.totalorder %s15, 0
    %p110 = por %p108, %p109
    %p111 = scmp.le.s32.totalorder 1, %s9
    %p112 = scmp.lt.s32.totalorder %s9, 26
    %p113 = pnand %p111, %p112
    %p114 = pneg %p113
    // Predicated region
    $region9: #{pallas_linear.1} parent=5 // pred_check
      _
    $region10: #{pallas_linear.1} parent=5 // pred_check_branch
      %116 = sbr.rel (%p113) target = $region12
    $region11: #{pallas_linear.1} parent=5 // pred_region
      %s117 = ssub.s32 %s9, 1
      // Predicated region
      $region13: #{pallas_linear.1} parent=11 // pred_check
        %p118 = pneg %p56
      $region14: #{pallas_linear.1} parent=11 // pred_check_branch
        %120 = sbr.rel (%p118) target = $region16
      $region15: #{pallas_linear.1} parent=11 // pred_region
        _
      $region16: #{pallas_linear.1} parent=11 // pred_fallthru
        _
      // Predicated region
      $region17: #{pallas_linear.1} parent=11 // pred_check
        %p121 = pneg %p77
      $region18: #{pallas_linear.1} parent=11 // pred_check_branch
        %123 = sbr.rel (%p121) target = $region20
      $region19: #{pallas_linear.1} parent=11 // pred_region
        _
      $region20: #{pallas_linear.1} parent=11 // pred_fallthru
        _
    $region12: #{pallas_linear.1} parent=5 // pred_fallthru
      _
    %p124 = scmp.lt.s32.totalorder %s9, 25
    // Predicated region
    $region21: #{pallas_linear.1} parent=5 // pred_check
      %p125 = pneg %p124
    $region22: #{pallas_linear.1} parent=5 // pred_check_branch
      %127 = sbr.rel (%p125) target = $region24
    $region23: #{pallas_linear.1} parent=5 // pred_region
      // Predicated region
      $region25: #{pallas_linear.1} parent=23 // pred_check
        %p128 = pneg %p29
      $region26: #{pallas_linear.1} parent=23 // pred_check_branch
        %130 = sbr.rel (%p128) target = $region28
      $region27: #{pallas_linear.1} parent=23 // pred_region
        %s131 = smul.u32 128, %s9
        %p132 = scmp.lt.s32.totalorder %s131, 3199
        %s133 = scalar_select %p132, %s131, 3199
        %s134 = smul.addr %s133, 2
        %s135 = smul.addr %s134, 4
        %s136 = scalar_lea.vmem %s0, %s135
        %s137 = smul.u32 128, %s9
      $region28: #{pallas_linear.1} parent=23 // pred_fallthru
        _
    $region24: #{pallas_linear.1} parent=5 // pred_fallthru
      _
    %p138 = scmp.le.s32.totalorder 1, %s9
    %p139 = scmp.lt.s32.totalorder %s9, 26
    %p140 = pnand %p138, %p139
    %p141 = pneg %p140
    // Predicated region
    $region29: #{pallas_linear.1} parent=5 // pred_check
      _
    $region30: #{pallas_linear.1} parent=5 // pred_check_branch
      %143 = sbr.rel (%p140) target = $region32
    $region31: #{pallas_linear.1} parent=5 // pred_region
      %s144 = ssub.s32 %s9, 1
      %s145 = smul.u32 128, %s14
      %p146 = scmp.lt.s32.totalorder %s145, 3199
      %s147 = scalar_select %p146, %s145, 3199
      %s148 = smul.addr %s147, 2
      %s149 = smul.addr %s148, 4
      %s150 = scalar_lea.vmem %s0, %s149
      %p151 = pneg %p35
      %p152 = pneg %p32
      %p153 = pneg %p56
      %p154 = pneg %p53
      %p155 = pneg %p77
      %p156 = pneg %p74
      %p157 = pneg %p103
      %p158 = pneg %p100
      %s159 = smul.u32 128, %s14
      %p160 = scmp.lt.s32.totalorder %s159, 3199
      %s161 = scalar_select %p160, %s159, 3199
      %s162 = smul.addr %s161, 4
      %s163 = scalar_lea.vmem %s3, %s162
      %s164 = smul.u32 128, %s14
      %p165 = scmp.lt.s32.totalorder %s164, 3199
      %s166 = scalar_select %p165, %s164, 3199
      %s167 = smul.addr %s166, 2
      %s168 = smul.addr %s167, 4
      %s169 = scalar_lea.vmem %s0, %s168
      %s170 = smul.u32 128, %s14
      %s171 = smul.u32 128, %s14
      %p172 = scmp.lt.s32.totalorder %s171, 3199
      %s173 = scalar_select %p172, %s171, 3199
      %s174 = smul.addr %s173, 4
      %s175 = scalar_lea.vmem %s3, %s174
      %s176 = smul.u32 128, %s14
      %v178 = vld [vmem:[%s169] sm:$0xff]
      %v179 = vld [vmem:[%s169 + $0x8] sm:$0xff]
      %v180 = vld [vmem:[%s169 + $0x10] sm:$0xff]
      %v181 = vld [vmem:[%s169 + $0x18] sm:$0xff]
      %v182 = vld [vmem:[%s169 + $0x20] sm:$0xff]
      %v183 = vld [vmem:[%s169 + $0x28] sm:$0xff]
      %v184 = vld [vmem:[%s169 + $0x30] sm:$0xff]
      %v185 = vld [vmem:[%s169 + $0x38] sm:$0xff]
      %v186 = vld [vmem:[%s169 + $0x40] sm:$0xff]
      %v187 = vld [vmem:[%s169 + $0x48] sm:$0xff]
      %v188 = vld [vmem:[%s169 + $0x50] sm:$0xff]
      %v189 = vld [vmem:[%s169 + $0x58] sm:$0xff]
      %v190 = vld [vmem:[%s169 + $0x60] sm:$0xff]
      %v191 = vld [vmem:[%s169 + $0x68] sm:$0xff]
      %v192 = vld [vmem:[%s169 + $0x70] sm:$0xff]
      %v193 = vld [vmem:[%s169 + $0x78] sm:$0xff]
      %v194 = vld [vmem:[%s169 + $0x80] sm:$0xff]
      %v195 = vld [vmem:[%s169 + $0x88] sm:$0xff]
      %v196 = vld [vmem:[%s169 + $0x90] sm:$0xff]
      %v197 = vld [vmem:[%s169 + $0x98] sm:$0xff]
      %v198 = vld [vmem:[%s169 + $0xa0] sm:$0xff]
      %v199 = vld [vmem:[%s169 + $0xa8] sm:$0xff]
      %v200 = vld [vmem:[%s169 + $0xb0] sm:$0xff]
      %v201 = vld [vmem:[%s169 + $0xb8] sm:$0xff]
      %v202 = vld [vmem:[%s169 + $0xc0] sm:$0xff]
      %v203 = vld [vmem:[%s169 + $0xc8] sm:$0xff]
      %v204 = vld [vmem:[%s169 + $0xd0] sm:$0xff]
      %v205 = vld [vmem:[%s169 + $0xd8] sm:$0xff]
      %v206 = vld [vmem:[%s169 + $0xe0] sm:$0xff]
      %v207 = vld [vmem:[%s169 + $0xe8] sm:$0xff]
      %v208 = vld [vmem:[%s169 + $0xf0] sm:$0xff]
      %v209 = vld [vmem:[%s169 + $0xf8] sm:$0xff]
      %v210 = vld [vmem:[%s169 + $0x100] sm:$0xff]
      %v211 = vld [vmem:[%s169 + $0x108] sm:$0xff]
      %v212 = vld [vmem:[%s169 + $0x110] sm:$0xff]
      %v213 = vld [vmem:[%s169 + $0x118] sm:$0xff]
      %v214 = vld [vmem:[%s169 + $0x120] sm:$0xff]
      %v215 = vld [vmem:[%s169 + $0x128] sm:$0xff]
      %v216 = vld [vmem:[%s169 + $0x130] sm:$0xff]
      %v217 = vld [vmem:[%s169 + $0x138] sm:$0xff]
      %v218 = vld [vmem:[%s169 + $0x140] sm:$0xff]
      %v219 = vld [vmem:[%s169 + $0x148] sm:$0xff]
      %v220 = vld [vmem:[%s169 + $0x150] sm:$0xff]
      %v221 = vld [vmem:[%s169 + $0x158] sm:$0xff]
      %v222 = vld [vmem:[%s169 + $0x160] sm:$0xff]
      %v223 = vld [vmem:[%s169 + $0x168] sm:$0xff]
      %v224 = vld [vmem:[%s169 + $0x170] sm:$0xff]
      %v225 = vld [vmem:[%s169 + $0x178] sm:$0xff]
      %v226 = vld [vmem:[%s169 + $0x180] sm:$0xff]
      %v227 = vld [vmem:[%s169 + $0x188] sm:$0xff]
      %v228 = vld [vmem:[%s169 + $0x190] sm:$0xff]
      %v229 = vld [vmem:[%s169 + $0x198] sm:$0xff]
      %v230 = vld [vmem:[%s169 + $0x1a0] sm:$0xff]
      %v231 = vld [vmem:[%s169 + $0x1a8] sm:$0xff]
      %v232 = vld [vmem:[%s169 + $0x1b0] sm:$0xff]
      %v233 = vld [vmem:[%s169 + $0x1b8] sm:$0xff]
      %v234 = vld [vmem:[%s169 + $0x1c0] sm:$0xff]
      %v235 = vld [vmem:[%s169 + $0x1c8] sm:$0xff]
      %v236 = vld [vmem:[%s169 + $0x1d0] sm:$0xff]
      %v237 = vld [vmem:[%s169 + $0x1d8] sm:$0xff]
      %v238 = vld [vmem:[%s169 + $0x1e0] sm:$0xff]
      %v239 = vld [vmem:[%s169 + $0x1e8] sm:$0xff]
      %v240 = vld [vmem:[%s169 + $0x1f0] sm:$0xff]
      %v241 = vld [vmem:[%s169 + $0x1f8] sm:$0xff]
      %v242 = vld [vmem:[%s169 + $0x200] sm:$0xff]
      %v243 = vld [vmem:[%s169 + $0x208] sm:$0xff]
      %v244 = vld [vmem:[%s169 + $0x210] sm:$0xff]
      %v245 = vld [vmem:[%s169 + $0x218] sm:$0xff]
      %v246 = vld [vmem:[%s169 + $0x220] sm:$0xff]
      %v247 = vld [vmem:[%s169 + $0x228] sm:$0xff]
      %v248 = vld [vmem:[%s169 + $0x230] sm:$0xff]
      %v249 = vld [vmem:[%s169 + $0x238] sm:$0xff]
      %v250 = vld [vmem:[%s169 + $0x240] sm:$0xff]
      %v251 = vld [vmem:[%s169 + $0x248] sm:$0xff]
      %v252 = vld [vmem:[%s169 + $0x250] sm:$0xff]
      %v253 = vld [vmem:[%s169 + $0x258] sm:$0xff]
      %v254 = vld [vmem:[%s169 + $0x260] sm:$0xff]
      %v255 = vld [vmem:[%s169 + $0x268] sm:$0xff]
      %v256 = vld [vmem:[%s169 + $0x270] sm:$0xff]
      %v257 = vld [vmem:[%s169 + $0x278] sm:$0xff]
      %v258 = vld [vmem:[%s169 + $0x280] sm:$0xff]
      %v259 = vld [vmem:[%s169 + $0x288] sm:$0xff]
      %v260 = vld [vmem:[%s169 + $0x290] sm:$0xff]
      %v261 = vld [vmem:[%s169 + $0x298] sm:$0xff]
      %v262 = vld [vmem:[%s169 + $0x2a0] sm:$0xff]
      %v263 = vld [vmem:[%s169 + $0x2a8] sm:$0xff]
      %v264 = vld [vmem:[%s169 + $0x2b0] sm:$0xff]
      %v265 = vld [vmem:[%s169 + $0x2b8] sm:$0xff]
      %v266 = vld [vmem:[%s169 + $0x2c0] sm:$0xff]
      %v267 = vld [vmem:[%s169 + $0x2c8] sm:$0xff]
      %v268 = vld [vmem:[%s169 + $0x2d0] sm:$0xff]
      %v269 = vld [vmem:[%s169 + $0x2d8] sm:$0xff]
      %v270 = vld [vmem:[%s169 + $0x2e0] sm:$0xff]
      %v271 = vld [vmem:[%s169 + $0x2e8] sm:$0xff]
      %v272 = vld [vmem:[%s169 + $0x2f0] sm:$0xff]
      %v273 = vld [vmem:[%s169 + $0x2f8] sm:$0xff]
      %v274 = vld [vmem:[%s169 + $0x300] sm:$0xff]
      %v275 = vld [vmem:[%s169 + $0x308] sm:$0xff]
      %v276 = vld [vmem:[%s169 + $0x310] sm:$0xff]
      %v277 = vld [vmem:[%s169 + $0x318] sm:$0xff]
      %v278 = vld [vmem:[%s169 + $0x320] sm:$0xff]
      %v279 = vld [vmem:[%s169 + $0x328] sm:$0xff]
      %v280 = vld [vmem:[%s169 + $0x330] sm:$0xff]
      %v281 = vld [vmem:[%s169 + $0x338] sm:$0xff]
      %v282 = vld [vmem:[%s169 + $0x340] sm:$0xff]
      %v283 = vld [vmem:[%s169 + $0x348] sm:$0xff]
      %v284 = vld [vmem:[%s169 + $0x350] sm:$0xff]
      %v285 = vld [vmem:[%s169 + $0x358] sm:$0xff]
      %v286 = vld [vmem:[%s169 + $0x360] sm:$0xff]
      %v287 = vld [vmem:[%s169 + $0x368] sm:$0xff]
      %v288 = vld [vmem:[%s169 + $0x370] sm:$0xff]
      %v289 = vld [vmem:[%s169 + $0x378] sm:$0xff]
      %v290 = vld [vmem:[%s169 + $0x380] sm:$0xff]
      %v291 = vld [vmem:[%s169 + $0x388] sm:$0xff]
      %v292 = vld [vmem:[%s169 + $0x390] sm:$0xff]
      %v293 = vld [vmem:[%s169 + $0x398] sm:$0xff]
      %v294 = vld [vmem:[%s169 + $0x3a0] sm:$0xff]
      %v295 = vld [vmem:[%s169 + $0x3a8] sm:$0xff]
      %v296 = vld [vmem:[%s169 + $0x3b0] sm:$0xff]
      %v297 = vld [vmem:[%s169 + $0x3b8] sm:$0xff]
      %v298 = vld [vmem:[%s169 + $0x3c0] sm:$0xff]
      %v299 = vld [vmem:[%s169 + $0x3c8] sm:$0xff]
      %v300 = vld [vmem:[%s169 + $0x3d0] sm:$0xff]
      %v301 = vld [vmem:[%s169 + $0x3d8] sm:$0xff]
      %v302 = vld [vmem:[%s169 + $0x3e0] sm:$0xff]
      %v303 = vld [vmem:[%s169 + $0x3e8] sm:$0xff]
      %v304 = vld [vmem:[%s169 + $0x3f0] sm:$0xff]
      %v305 = vld [vmem:[%s169 + $0x3f8] sm:$0xff]
      %v306 = vld [vmem:[%s1] sm:$0xf]
      %v307 = vld [vmem:[%s1 + $0x4] sm:$0xf]
      %v308 = vld [vmem:[%s1 + $0x8] sm:$0xf]
      %v309 = vld [vmem:[%s1 + $0xc] sm:$0xf]
      %v310 = vld [vmem:[%s1 + $0x10] sm:$0xf]
      %v311 = vld [vmem:[%s1 + $0x14] sm:$0xf]
      %v312 = vld [vmem:[%s1 + $0x18] sm:$0xf]
      %v313 = vld [vmem:[%s1 + $0x1c] sm:$0xf]
      %v314 = vld [vmem:[%s1 + $0x20] sm:$0xf]
      %v315 = vld [vmem:[%s1 + $0x24] sm:$0xf]
      %v316 = vld [vmem:[%s1 + $0x28] sm:$0xf]
      %v317 = vld [vmem:[%s1 + $0x2c] sm:$0xf]
      %v318 = vld [vmem:[%s1 + $0x30] sm:$0xf]
      %v319 = vld [vmem:[%s1 + $0x34] sm:$0xf]
      %v320 = vld [vmem:[%s1 + $0x38] sm:$0xf]
      %v321 = vld [vmem:[%s1 + $0x3c] sm:$0xf]
      %v322 = vld [vmem:[%s1 + $0x40] sm:$0xf]
      %v323 = vld [vmem:[%s1 + $0x44] sm:$0xf]
      %v324 = vld [vmem:[%s1 + $0x48] sm:$0x3]
      %v325 = vld [vmem:[%s2] sm:$0x1]
      %v327 = vlaneseq
      %v328 = vshrl.u32 %v327, 7
      %v329 = vsub.s32 0, %v328
      %v330 = vrot.slane %v325, %v329
      %v460 = vunpack.c.l.b16 %v178
      %v461 = vunpack.c.h.b16 %v178
      %v462 = vunpack.c.l.b16 %v179
      %v463 = vunpack.c.h.b16 %v179
      %v464 = vunpack.c.l.b16 %v180
      %v465 = vunpack.c.h.b16 %v180
      %v466 = vunpack.c.l.b16 %v181
      %v467 = vunpack.c.h.b16 %v181
      %v468 = vunpack.c.l.b16 %v182
      %v469 = vunpack.c.h.b16 %v182
      %v470 = vunpack.c.l.b16 %v183
      %v471 = vunpack.c.h.b16 %v183
      %v472 = vunpack.c.l.b16 %v184
      %v473 = vunpack.c.h.b16 %v184
      %v474 = vunpack.c.l.b16 %v185
      %v475 = vunpack.c.h.b16 %v185
      %v476 = vunpack.c.l.b16 %v186
      %v477 = vunpack.c.h.b16 %v186
      %v478 = vunpack.c.l.b16 %v187
      %v479 = vunpack.c.h.b16 %v187
      %v480 = vunpack.c.l.b16 %v188
      %v481 = vunpack.c.h.b16 %v188
      %v482 = vunpack.c.l.b16 %v189
      %v483 = vunpack.c.h.b16 %v189
      %v484 = vunpack.c.l.b16 %v190
      %v485 = vunpack.c.h.b16 %v190
      %v486 = vunpack.c.l.b16 %v191
      %v487 = vunpack.c.h.b16 %v191
      %v488 = vunpack.c.l.b16 %v192
      %v489 = vunpack.c.h.b16 %v192
      %v490 = vunpack.c.l.b16 %v193
      %v491 = vunpack.c.h.b16 %v193
      %v492 = vunpack.c.l.b16 %v194
      %v493 = vunpack.c.h.b16 %v194
      %v494 = vunpack.c.l.b16 %v195
      %v495 = vunpack.c.h.b16 %v195
      %v496 = vunpack.c.l.b16 %v196
      %v497 = vunpack.c.h.b16 %v196
      %v498 = vunpack.c.l.b16 %v197
      %v499 = vunpack.c.h.b16 %v197
      %v500 = vunpack.c.l.b16 %v198
      %v501 = vunpack.c.h.b16 %v198
      %v502 = vunpack.c.l.b16 %v199
      %v503 = vunpack.c.h.b16 %v199
      %v504 = vunpack.c.l.b16 %v200
      %v505 = vunpack.c.h.b16 %v200
      %v506 = vunpack.c.l.b16 %v201
      %v507 = vunpack.c.h.b16 %v201
      %v508 = vunpack.c.l.b16 %v202
      %v509 = vunpack.c.h.b16 %v202
      %v510 = vunpack.c.l.b16 %v203
      %v511 = vunpack.c.h.b16 %v203
      %v512 = vunpack.c.l.b16 %v204
      %v513 = vunpack.c.h.b16 %v204
      %v514 = vunpack.c.l.b16 %v205
      %v515 = vunpack.c.h.b16 %v205
      %v516 = vunpack.c.l.b16 %v206
      %v517 = vunpack.c.h.b16 %v206
      %v518 = vunpack.c.l.b16 %v207
      %v519 = vunpack.c.h.b16 %v207
      %v520 = vunpack.c.l.b16 %v208
      %v521 = vunpack.c.h.b16 %v208
      %v522 = vunpack.c.l.b16 %v209
      %v523 = vunpack.c.h.b16 %v209
      %v524 = vunpack.c.l.b16 %v210
      %v525 = vunpack.c.h.b16 %v210
      %v526 = vunpack.c.l.b16 %v211
      %v527 = vunpack.c.h.b16 %v211
      %v528 = vunpack.c.l.b16 %v212
      %v529 = vunpack.c.h.b16 %v212
      %v530 = vunpack.c.l.b16 %v213
      %v531 = vunpack.c.h.b16 %v213
      %v532 = vunpack.c.l.b16 %v214
      %v533 = vunpack.c.h.b16 %v214
      %v534 = vunpack.c.l.b16 %v215
      %v535 = vunpack.c.h.b16 %v215
      %v536 = vunpack.c.l.b16 %v216
      %v537 = vunpack.c.h.b16 %v216
      %v538 = vunpack.c.l.b16 %v217
      %v539 = vunpack.c.h.b16 %v217
      %v540 = vunpack.c.l.b16 %v218
      %v541 = vunpack.c.h.b16 %v218
      %v542 = vunpack.c.l.b16 %v219
      %v543 = vunpack.c.h.b16 %v219
      %v544 = vunpack.c.l.b16 %v220
      %v545 = vunpack.c.h.b16 %v220
      %v546 = vunpack.c.l.b16 %v221
      %v547 = vunpack.c.h.b16 %v221
      %v548 = vunpack.c.l.b16 %v222
      %v549 = vunpack.c.h.b16 %v222
      %v550 = vunpack.c.l.b16 %v223
      %v551 = vunpack.c.h.b16 %v223
      %v552 = vunpack.c.l.b16 %v224
      %v553 = vunpack.c.h.b16 %v224
      %v554 = vunpack.c.l.b16 %v225
      %v555 = vunpack.c.h.b16 %v225
      %v556 = vunpack.c.l.b16 %v226
      %v557 = vunpack.c.h.b16 %v226
      %v558 = vunpack.c.l.b16 %v227
      %v559 = vunpack.c.h.b16 %v227
      %v560 = vunpack.c.l.b16 %v228
      %v561 = vunpack.c.h.b16 %v228
      %v562 = vunpack.c.l.b16 %v229
      %v563 = vunpack.c.h.b16 %v229
      %v564 = vunpack.c.l.b16 %v230
      %v565 = vunpack.c.h.b16 %v230
      %v566 = vunpack.c.l.b16 %v231
      %v567 = vunpack.c.h.b16 %v231
      %v568 = vunpack.c.l.b16 %v232
      %v569 = vunpack.c.h.b16 %v232
      %v570 = vunpack.c.l.b16 %v233
      %v571 = vunpack.c.h.b16 %v233
      %v572 = vunpack.c.l.b16 %v234
      %v573 = vunpack.c.h.b16 %v234
      %v574 = vunpack.c.l.b16 %v235
      %v575 = vunpack.c.h.b16 %v235
      %v576 = vunpack.c.l.b16 %v236
      %v577 = vunpack.c.h.b16 %v236
      %v578 = vunpack.c.l.b16 %v237
      %v579 = vunpack.c.h.b16 %v237
      %v580 = vunpack.c.l.b16 %v238
      %v581 = vunpack.c.h.b16 %v238
      %v582 = vunpack.c.l.b16 %v239
      %v583 = vunpack.c.h.b16 %v239
      %v584 = vunpack.c.l.b16 %v240
      %v585 = vunpack.c.h.b16 %v240
      %v586 = vunpack.c.l.b16 %v241
      %v587 = vunpack.c.h.b16 %v241
      %v588 = vunpack.c.l.b16 %v242
      %v589 = vunpack.c.h.b16 %v242
      %v590 = vunpack.c.l.b16 %v243
      %v591 = vunpack.c.h.b16 %v243
      %v592 = vunpack.c.l.b16 %v244
      %v593 = vunpack.c.h.b16 %v244
      %v594 = vunpack.c.l.b16 %v245
      %v595 = vunpack.c.h.b16 %v245
      %v596 = vunpack.c.l.b16 %v246
      %v597 = vunpack.c.h.b16 %v246
      %v598 = vunpack.c.l.b16 %v247
      %v599 = vunpack.c.h.b16 %v247
      %v600 = vunpack.c.l.b16 %v248
      %v601 = vunpack.c.h.b16 %v248
      %v602 = vunpack.c.l.b16 %v249
      %v603 = vunpack.c.h.b16 %v249
      %v604 = vunpack.c.l.b16 %v250
      %v605 = vunpack.c.h.b16 %v250
      %v606 = vunpack.c.l.b16 %v251
      %v607 = vunpack.c.h.b16 %v251
      %v608 = vunpack.c.l.b16 %v252
      %v609 = vunpack.c.h.b16 %v252
      %v610 = vunpack.c.l.b16 %v253
      %v611 = vunpack.c.h.b16 %v253
      %v612 = vunpack.c.l.b16 %v254
      %v613 = vunpack.c.h.b16 %v254
      %v614 = vunpack.c.l.b16 %v255
      %v615 = vunpack.c.h.b16 %v255
      %v616 = vunpack.c.l.b16 %v256
      %v617 = vunpack.c.h.b16 %v256
      %v618 = vunpack.c.l.b16 %v257
      %v619 = vunpack.c.h.b16 %v257
      %v620 = vunpack.c.l.b16 %v258
      %v621 = vunpack.c.h.b16 %v258
      %v622 = vunpack.c.l.b16 %v259
      %v623 = vunpack.c.h.b16 %v259
      %v624 = vunpack.c.l.b16 %v260
      %v625 = vunpack.c.h.b16 %v260
      %v626 = vunpack.c.l.b16 %v261
      %v627 = vunpack.c.h.b16 %v261
      %v628 = vunpack.c.l.b16 %v262
      %v629 = vunpack.c.h.b16 %v262
      %v630 = vunpack.c.l.b16 %v263
      %v631 = vunpack.c.h.b16 %v263
      %v632 = vunpack.c.l.b16 %v264
      %v633 = vunpack.c.h.b16 %v264
      %v634 = vunpack.c.l.b16 %v265
      %v635 = vunpack.c.h.b16 %v265
      %v636 = vunpack.c.l.b16 %v266
      %v637 = vunpack.c.h.b16 %v266
      %v638 = vunpack.c.l.b16 %v267
      %v639 = vunpack.c.h.b16 %v267
      %v640 = vunpack.c.l.b16 %v268
      %v641 = vunpack.c.h.b16 %v268
      %v642 = vunpack.c.l.b16 %v269
      %v643 = vunpack.c.h.b16 %v269
      %v644 = vunpack.c.l.b16 %v270
      %v645 = vunpack.c.h.b16 %v270
      %v646 = vunpack.c.l.b16 %v271
      %v647 = vunpack.c.h.b16 %v271
      %v648 = vunpack.c.l.b16 %v272
      %v649 = vunpack.c.h.b16 %v272
      %v650 = vunpack.c.l.b16 %v273
      %v651 = vunpack.c.h.b16 %v273
      %v652 = vunpack.c.l.b16 %v274
      %v653 = vunpack.c.h.b16 %v274
      %v654 = vunpack.c.l.b16 %v275
      %v655 = vunpack.c.h.b16 %v275
      %v656 = vunpack.c.l.b16 %v276
      %v657 = vunpack.c.h.b16 %v276
      %v658 = vunpack.c.l.b16 %v277
      %v659 = vunpack.c.h.b16 %v277
      %v660 = vunpack.c.l.b16 %v278
      %v661 = vunpack.c.h.b16 %v278
      %v662 = vunpack.c.l.b16 %v279
      %v663 = vunpack.c.h.b16 %v279
      %v664 = vunpack.c.l.b16 %v280
      %v665 = vunpack.c.h.b16 %v280
      %v666 = vunpack.c.l.b16 %v281
      %v667 = vunpack.c.h.b16 %v281
      %v668 = vunpack.c.l.b16 %v282
      %v669 = vunpack.c.h.b16 %v282
      %v670 = vunpack.c.l.b16 %v283
      %v671 = vunpack.c.h.b16 %v283
      %v672 = vunpack.c.l.b16 %v284
      %v673 = vunpack.c.h.b16 %v284
      %v674 = vunpack.c.l.b16 %v285
      %v675 = vunpack.c.h.b16 %v285
      %v676 = vunpack.c.l.b16 %v286
      %v677 = vunpack.c.h.b16 %v286
      %v678 = vunpack.c.l.b16 %v287
      %v679 = vunpack.c.h.b16 %v287
      %v680 = vunpack.c.l.b16 %v288
      %v681 = vunpack.c.h.b16 %v288
      %v682 = vunpack.c.l.b16 %v289
      %v683 = vunpack.c.h.b16 %v289
      %v684 = vunpack.c.l.b16 %v290
      %v685 = vunpack.c.h.b16 %v290
      %v686 = vunpack.c.l.b16 %v291
      %v687 = vunpack.c.h.b16 %v291
      %v688 = vunpack.c.l.b16 %v292
      %v689 = vunpack.c.h.b16 %v292
      %v690 = vunpack.c.l.b16 %v293
      %v691 = vunpack.c.h.b16 %v293
      %v692 = vunpack.c.l.b16 %v294
      %v693 = vunpack.c.h.b16 %v294
      %v694 = vunpack.c.l.b16 %v295
      %v695 = vunpack.c.h.b16 %v295
      %v696 = vunpack.c.l.b16 %v296
      %v697 = vunpack.c.h.b16 %v296
      %v698 = vunpack.c.l.b16 %v297
      %v699 = vunpack.c.h.b16 %v297
      %v700 = vunpack.c.l.b16 %v298
      %v701 = vunpack.c.h.b16 %v298
      %v702 = vunpack.c.l.b16 %v299
      %v703 = vunpack.c.h.b16 %v299
      %v704 = vunpack.c.l.b16 %v300
      %v705 = vunpack.c.h.b16 %v300
      %v706 = vunpack.c.l.b16 %v301
      %v707 = vunpack.c.h.b16 %v301
      %v708 = vunpack.c.l.b16 %v302
      %v709 = vunpack.c.h.b16 %v302
      %v710 = vunpack.c.l.b16 %v303
      %v711 = vunpack.c.h.b16 %v303
      %v712 = vunpack.c.l.b16 %v304
      %v713 = vunpack.c.h.b16 %v304
      %v714 = vunpack.c.l.b16 %v305
      %v715 = vunpack.c.h.b16 %v305
      %v716 = vpack.c.b16 %v462, %v460
      %v717 = vpack.c.b16 %v463, %v461
      %v718 = vpack.c.b16 %v466, %v464
      %v719 = vpack.c.b16 %v467, %v465
      %v720 = vpack.c.b16 %v470, %v468
      %v721 = vpack.c.b16 %v471, %v469
      %v722 = vpack.c.b16 %v474, %v472
      %v723 = vpack.c.b16 %v475, %v473
      %v724 = vpack.c.b16 %v478, %v476
      %v725 = vpack.c.b16 %v479, %v477
      %v726 = vpack.c.b16 %v482, %v480
      %v727 = vpack.c.b16 %v483, %v481
      %v728 = vpack.c.b16 %v486, %v484
      %v729 = vpack.c.b16 %v487, %v485
      %v730 = vpack.c.b16 %v490, %v488
      %v731 = vpack.c.b16 %v491, %v489
      %v732 = vpack.c.b16 %v494, %v492
      %v733 = vpack.c.b16 %v495, %v493
      %v734 = vpack.c.b16 %v498, %v496
      %v735 = vpack.c.b16 %v499, %v497
      %v736 = vpack.c.b16 %v502, %v500
      %v737 = vpack.c.b16 %v503, %v501
      %v738 = vpack.c.b16 %v506, %v504
      %v739 = vpack.c.b16 %v507, %v505
      %v740 = vpack.c.b16 %v510, %v508
      %v741 = vpack.c.b16 %v511, %v509
      %v742 = vpack.c.b16 %v514, %v512
      %v743 = vpack.c.b16 %v515, %v513
      %v744 = vpack.c.b16 %v518, %v516
      %v745 = vpack.c.b16 %v519, %v517
      %v746 = vpack.c.b16 %v522, %v520
      %v747 = vpack.c.b16 %v523, %v521
      %v748 = vpack.c.b16 %v526, %v524
      %v749 = vpack.c.b16 %v527, %v525
      %v750 = vpack.c.b16 %v530, %v528
      %v751 = vpack.c.b16 %v531, %v529
      %v752 = vpack.c.b16 %v534, %v532
      %v753 = vpack.c.b16 %v535, %v533
      %v754 = vpack.c.b16 %v538, %v536
      %v755 = vpack.c.b16 %v539, %v537
      %v756 = vpack.c.b16 %v542, %v540
      %v757 = vpack.c.b16 %v543, %v541
      %v758 = vpack.c.b16 %v546, %v544
      %v759 = vpack.c.b16 %v547, %v545
      %v760 = vpack.c.b16 %v550, %v548
      %v761 = vpack.c.b16 %v551, %v549
      %v762 = vpack.c.b16 %v554, %v552
      %v763 = vpack.c.b16 %v555, %v553
      %v764 = vpack.c.b16 %v558, %v556
      %v765 = vpack.c.b16 %v559, %v557
      %v766 = vpack.c.b16 %v562, %v560
      %v767 = vpack.c.b16 %v563, %v561
      %v768 = vpack.c.b16 %v566, %v564
      %v769 = vpack.c.b16 %v567, %v565
      %v770 = vpack.c.b16 %v570, %v568
      %v771 = vpack.c.b16 %v571, %v569
      %v772 = vpack.c.b16 %v574, %v572
      %v773 = vpack.c.b16 %v575, %v573
      %v774 = vpack.c.b16 %v578, %v576
      %v775 = vpack.c.b16 %v579, %v577
      %v776 = vpack.c.b16 %v582, %v580
      %v777 = vpack.c.b16 %v583, %v581
      %v778 = vpack.c.b16 %v586, %v584
      %v779 = vpack.c.b16 %v587, %v585
      %v780 = vpack.c.b16 %v590, %v588
      %v781 = vpack.c.b16 %v591, %v589
      %v782 = vpack.c.b16 %v594, %v592
      %v783 = vpack.c.b16 %v595, %v593
      %v784 = vpack.c.b16 %v598, %v596
      %v785 = vpack.c.b16 %v599, %v597
      %v786 = vpack.c.b16 %v602, %v600
      %v787 = vpack.c.b16 %v603, %v601
      %v788 = vpack.c.b16 %v606, %v604
      %v789 = vpack.c.b16 %v607, %v605
      %v790 = vpack.c.b16 %v610, %v608
      %v791 = vpack.c.b16 %v611, %v609
      %v792 = vpack.c.b16 %v614, %v612
      %v793 = vpack.c.b16 %v615, %v613
      %v794 = vpack.c.b16 %v618, %v616
      %v795 = vpack.c.b16 %v619, %v617
      %v796 = vpack.c.b16 %v622, %v620
      %v797 = vpack.c.b16 %v623, %v621
      %v798 = vpack.c.b16 %v626, %v624
      %v799 = vpack.c.b16 %v627, %v625
      %v800 = vpack.c.b16 %v630, %v628
      %v801 = vpack.c.b16 %v631, %v629
      %v802 = vpack.c.b16 %v634, %v632
      %v803 = vpack.c.b16 %v635, %v633
      %v804 = vpack.c.b16 %v638, %v636
      %v805 = vpack.c.b16 %v639, %v637
      %v806 = vpack.c.b16 %v642, %v640
      %v807 = vpack.c.b16 %v643, %v641
      %v808 = vpack.c.b16 %v646, %v644
      %v809 = vpack.c.b16 %v647, %v645
      %v810 = vpack.c.b16 %v650, %v648
      %v811 = vpack.c.b16 %v651, %v649
      %v812 = vpack.c.b16 %v654, %v652
      %v813 = vpack.c.b16 %v655, %v653
      %v814 = vpack.c.b16 %v658, %v656
      %v815 = vpack.c.b16 %v659, %v657
      %v816 = vpack.c.b16 %v662, %v660
      %v817 = vpack.c.b16 %v663, %v661
      %v818 = vpack.c.b16 %v666, %v664
      %v819 = vpack.c.b16 %v667, %v665
      %v820 = vpack.c.b16 %v670, %v668
      %v821 = vpack.c.b16 %v671, %v669
      %v822 = vpack.c.b16 %v674, %v672
      %v823 = vpack.c.b16 %v675, %v673
      %v824 = vpack.c.b16 %v678, %v676
      %v825 = vpack.c.b16 %v679, %v677
      %v826 = vpack.c.b16 %v682, %v680
      %v827 = vpack.c.b16 %v683, %v681
      %v828 = vpack.c.b16 %v686, %v684
      %v829 = vpack.c.b16 %v687, %v685
      %v830 = vpack.c.b16 %v690, %v688
      %v831 = vpack.c.b16 %v691, %v689
      %v832 = vpack.c.b16 %v694, %v692
      %v833 = vpack.c.b16 %v695, %v693
      %v834 = vpack.c.b16 %v698, %v696
      %v835 = vpack.c.b16 %v699, %v697
      %v836 = vpack.c.b16 %v702, %v700
      %v837 = vpack.c.b16 %v703, %v701
      %v838 = vpack.c.b16 %v706, %v704
      %v839 = vpack.c.b16 %v707, %v705
      %v840 = vpack.c.b16 %v710, %v708
      %v841 = vpack.c.b16 %v711, %v709
      %v842 = vpack.c.b16 %v714, %v712
      %v843 = vpack.c.b16 %v715, %v713
      %v927 = vunpack.c.l.b16 %v306
      %v928 = vunpack.c.l.b16 %v307
      %v929 = vunpack.c.l.b16 %v308
      %v930 = vunpack.c.l.b16 %v309
      %v931 = vunpack.c.l.b16 %v310
      %v932 = vunpack.c.l.b16 %v311
      %v933 = vunpack.c.l.b16 %v312
      %v934 = vunpack.c.l.b16 %v313
      %v935 = vunpack.c.l.b16 %v314
      %v936 = vunpack.c.l.b16 %v315
      %v937 = vunpack.c.l.b16 %v316
      %v938 = vunpack.c.l.b16 %v317
      %v939 = vunpack.c.l.b16 %v318
      %v940 = vunpack.c.l.b16 %v319
      %v941 = vunpack.c.l.b16 %v320
      %v942 = vunpack.c.l.b16 %v321
      %v943 = vunpack.c.l.b16 %v322
      %v944 = vunpack.c.l.b16 %v323
      %v945 = vunpack.c.l.b16 %v324
      %v946 = vpack.c.b16 %v928, %v927
      %v947 = vpack.c.b16 %v930, %v929
      %v948 = vpack.c.b16 %v932, %v931
      %v949 = vpack.c.b16 %v934, %v933
      %v950 = vpack.c.b16 %v936, %v935
      %v951 = vpack.c.b16 %v938, %v937
      %v952 = vpack.c.b16 %v940, %v939
      %v953 = vpack.c.b16 %v942, %v941
      %v954 = vpack.c.b16 %v944, %v943
      %v955 = vpack.c.b16 %v945, %v945
      %vm965 = vcmask 154624
      %v967 = vsel %vm965, %v717, 0
      %v970 = vsel %vm965, %v719, 0
      %v973 = vsel %vm965, %v721, 0
      %v976 = vsel %vm965, %v723, 0
      %v979 = vsel %vm965, %v725, 0
      %v982 = vsel %vm965, %v727, 0
      %v985 = vsel %vm965, %v729, 0
      %v988 = vsel %vm965, %v731, 0
      %v991 = vsel %vm965, %v733, 0
      %v994 = vsel %vm965, %v735, 0
      %v997 = vsel %vm965, %v737, 0
      %v1000 = vsel %vm965, %v739, 0
      %v1003 = vsel %vm965, %v741, 0
      %v1006 = vsel %vm965, %v743, 0
      %v1009 = vsel %vm965, %v745, 0
      %v1012 = vsel %vm965, %v747, 0
      %v1015 = vsel %vm965, %v749, 0
      %v1018 = vsel %vm965, %v751, 0
      %v1021 = vsel %vm965, %v753, 0
      %v1024 = vsel %vm965, %v755, 0
      %v1027 = vsel %vm965, %v757, 0
      %v1030 = vsel %vm965, %v759, 0
      %v1033 = vsel %vm965, %v761, 0
      %v1036 = vsel %vm965, %v763, 0
      %v1039 = vsel %vm965, %v765, 0
      %v1042 = vsel %vm965, %v767, 0
      %v1045 = vsel %vm965, %v769, 0
      %v1048 = vsel %vm965, %v771, 0
      %v1051 = vsel %vm965, %v773, 0
      %v1054 = vsel %vm965, %v775, 0
      %v1057 = vsel %vm965, %v777, 0
      %v1060 = vsel %vm965, %v779, 0
      %v1063 = vsel %vm965, %v781, 0
      %v1066 = vsel %vm965, %v783, 0
      %v1069 = vsel %vm965, %v785, 0
      %v1072 = vsel %vm965, %v787, 0
      %v1075 = vsel %vm965, %v789, 0
      %v1078 = vsel %vm965, %v791, 0
      %v1081 = vsel %vm965, %v793, 0
      %v1084 = vsel %vm965, %v795, 0
      %v1087 = vsel %vm965, %v797, 0
      %v1090 = vsel %vm965, %v799, 0
      %v1093 = vsel %vm965, %v801, 0
      %v1096 = vsel %vm965, %v803, 0
      %v1099 = vsel %vm965, %v805, 0
      %v1102 = vsel %vm965, %v807, 0
      %v1105 = vsel %vm965, %v809, 0
      %v1108 = vsel %vm965, %v811, 0
      %v1111 = vsel %vm965, %v813, 0
      %v1114 = vsel %vm965, %v815, 0
      %v1117 = vsel %vm965, %v817, 0
      %v1120 = vsel %vm965, %v819, 0
      %v1123 = vsel %vm965, %v821, 0
      %v1126 = vsel %vm965, %v823, 0
      %v1129 = vsel %vm965, %v825, 0
      %v1132 = vsel %vm965, %v827, 0
      %v1135 = vsel %vm965, %v829, 0
      %v1138 = vsel %vm965, %v831, 0
      %v1141 = vsel %vm965, %v833, 0
      %v1144 = vsel %vm965, %v835, 0
      %v1147 = vsel %vm965, %v837, 0
      %v1150 = vsel %vm965, %v839, 0
      %v1153 = vsel %vm965, %v841, 0
      %v1156 = vsel %vm965, %v843, 0
      %vm1158 = vcmask 1040384
      %vm1159 = vcmask 1041408
      %v1160 = vsel %vm1158, 4294967295, 65535
      %v1161 = vsel %vm1159, %v1160, 0
      %v1163 = vand.u32 %v955, %v1161
      %1165 = vmatprep.subr.bf16.mxu0 0
      %1166 = vmatpush1.bf16.msra.mxu0 %v946
      %1167 = vmatprep.subr.bf16.mxu0 0
      %1168 = vmatpush1.bf16.msra.mxu0 %v947
      %1169 = vmatprep.subr.bf16.mxu0 0
      %1170 = vmatpush1.bf16.msra.mxu0 %v948
      %1171 = vmatprep.subr.bf16.mxu0 0
      %1172 = vmatpush1.bf16.msra.mxu0 %v949
      %1173 = vmatprep.subr.bf16.mxu0 0
      %1174 = vmatpush1.bf16.msra.mxu0 %v950
      %1175 = vmatprep.subr.bf16.mxu0 0
      %1176 = vmatpush1.bf16.msra.mxu0 %v951
      %1177 = vmatprep.subr.bf16.mxu0 0
      %1178 = vmatpush1.bf16.msra.mxu0 %v952
      %1179 = vmatprep.subr.bf16.mxu0 0
      %1180 = vmatpush1.bf16.msra.mxu0 %v953
      %1181 = vmatprep.subr.bf16.mxu0 0
      %1182 = vmatpush1.bf16.msra.mxu0 %v954
      %1183 = vmatprep.subr.bf16.mxu0 0
      %1184 = vmatpush1.bf16.msra.mxu0 %v1163
      %1185 = vmatprep.subr.bf16.mxu0 0
      %1186 = vmatpush1.bf16.msra.mxu0 0
      %1187 = vmatprep.subr.bf16.mxu0 0
      %1188 = vmatpush1.bf16.msra.mxu0 0
      %1189 = vmatprep.subr.bf16.mxu0 0
      %1190 = vmatpush1.bf16.msra.mxu0 0
      %1191 = vmatprep.subr.bf16.mxu0 0
      %1192 = vmatpush1.bf16.msra.mxu0 0
      %1193 = vmatprep.subr.bf16.mxu0 0
      %1194 = vmatpush1.bf16.msra.mxu0 0
      %1195 = vmatprep.subr.bf16.mxu0 0
      %1196 = vmatpush1.bf16.msra.mxu0 0
      %1197 = vmatprep.mubr.bf16.mxu0 %v967
      %1198 = vmatmul.mubr.bf16.gmra.mrb[0].mxu0 %v716
      %v1199 = vpop.f32.mrb[0].mxu0
      %v1200 = vadd.f32 %v330, %v1199
      %v1201 = vpop.f32.mrb[0].mxu0
      %v1202 = vpop.f32.mrb[0].mxu0
      %v1203 = vadd.f32 %v330, %v1202
      %v1204 = vpop.f32.mrb[0].mxu0
      %1205 = vmatprep.mubr.bf16.mxu0 %v970
      %1206 = vmatmul.mubr.bf16.gmra.mrb[0].mxu0 %v718
      %v1207 = vpop.f32.mrb[0].mxu0
      %v1208 = vadd.f32 %v330, %v1207
      %v1209 = vpop.f32.mrb[0].mxu0
      %v1210 = vpop.f32.mrb[0].mxu0
      %v1211 = vadd.f32 %v330, %v1210
      %v1212 = vpop.f32.mrb[0].mxu0
      %1213 = vmatprep.mubr.bf16.mxu0 %v973
      %1214 = vmatmul.mubr.bf16.gmra.mrb[0].mxu0 %v720
      %v1215 = vpop.f32.mrb[0].mxu0
      %v1216 = vadd.f32 %v330, %v1215
      %v1217 = vpop.f32.mrb[0].mxu0
      %v1218 = vpop.f32.mrb[0].mxu0
      %v1219 = vadd.f32 %v330, %v1218
      %v1220 = vpop.f32.mrb[0].mxu0
      %1221 = vmatprep.mubr.bf16.mxu0 %v976
      %1222 = vmatmul.mubr.bf16.gmra.mrb[0].mxu0 %v722
      %v1223 = vpop.f32.mrb[0].mxu0
      %v1224 = vadd.f32 %v330, %v1223
      %v1225 = vpop.f32.mrb[0].mxu0
      %v1226 = vpop.f32.mrb[0].mxu0
      %v1227 = vadd.f32 %v330, %v1226
      %v1228 = vpop.f32.mrb[0].mxu0
      %1229 = vmatprep.mubr.bf16.mxu0 %v979
      %1230 = vmatmul.mubr.bf16.gmra.mrb[0].mxu0 %v724
      %v1231 = vpop.f32.mrb[0].mxu0
      %v1232 = vadd.f32 %v330, %v1231
      %v1233 = vpop.f32.mrb[0].mxu0
      %v1234 = vpop.f32.mrb[0].mxu0
      %v1235 = vadd.f32 %v330, %v1234
      %v1236 = vpop.f32.mrb[0].mxu0
      %1237 = vmatprep.mubr.bf16.mxu0 %v982
      %1238 = vmatmul.mubr.bf16.gmra.mrb[0].mxu0 %v726
      %v1239 = vpop.f32.mrb[0].mxu0
      %v1240 = vadd.f32 %v330, %v1239
      %v1241 = vpop.f32.mrb[0].mxu0
      %v1242 = vpop.f32.mrb[0].mxu0
      %v1243 = vadd.f32 %v330, %v1242
      %v1244 = vpop.f32.mrb[0].mxu0
      %1245 = vmatprep.mubr.bf16.mxu0 %v985
      %1246 = vmatmul.mubr.bf16.gmra.mrb[0].mxu0 %v728
      %v1247 = vpop.f32.mrb[0].mxu0
      %v1248 = vadd.f32 %v330, %v1247
      %v1249 = vpop.f32.mrb[0].mxu0
      %v1250 = vpop.f32.mrb[0].mxu0
      %v1251 = vadd.f32 %v330, %v1250
      %v1252 = vpop.f32.mrb[0].mxu0
      %1253 = vmatprep.mubr.bf16.mxu0 %v988
      %1254 = vmatmul.mubr.bf16.gmra.mrb[0].mxu0 %v730
      %v1255 = vpop.f32.mrb[0].mxu0
      %v1256 = vadd.f32 %v330, %v1255
      %v1257 = vpop.f32.mrb[0].mxu0
      %v1258 = vpop.f32.mrb[0].mxu0
      %v1259 = vadd.f32 %v330, %v1258
      %v1260 = vpop.f32.mrb[0].mxu0
      %1261 = vmatprep.mubr.bf16.mxu0 %v991
      %1262 = vmatmul.mubr.bf16.gmra.mrb[0].mxu0 %v732
      %v1263 = vpop.f32.mrb[0].mxu0
      %v1264 = vadd.f32 %v330, %v1263
      %v1265 = vpop.f32.mrb[0].mxu0
      %v1266 = vpop.f32.mrb[0].mxu0
      %v1267 = vadd.f32 %v330, %v1266
      %v1268 = vpop.f32.mrb[0].mxu0
      %1269 = vmatprep.mubr.bf16.mxu0 %v994
      %1270 = vmatmul.mubr.bf16.gmra.mrb[0].mxu0 %v734
      %v1271 = vpop.f32.mrb[0].mxu0
      %v1272 = vadd.f32 %v330, %v1271
      %v1273 = vpop.f32.mrb[0].mxu0
      %v1274 = vpop.f32.mrb[0].mxu0
      %v1275 = vadd.f32 %v330, %v1274
      %v1276 = vpop.f32.mrb[0].mxu0
      %1277 = vmatprep.mubr.bf16.mxu0 %v997
      %1278 = vmatmul.mubr.bf16.gmra.mrb[0].mxu0 %v736
      %v1279 = vpop.f32.mrb[0].mxu0
      %v1280 = vadd.f32 %v330, %v1279
      %v1281 = vpop.f32.mrb[0].mxu0
      %v1282 = vpop.f32.mrb[0].mxu0
      %v1283 = vadd.f32 %v330, %v1282
      %v1284 = vpop.f32.mrb[0].mxu0
      %1285 = vmatprep.mubr.bf16.mxu0 %v1000
      %1286 = vmatmul.mubr.bf16.gmra.mrb[0].mxu0 %v738
      %v1287 = vpop.f32.mrb[0].mxu0
      %v1288 = vadd.f32 %v330, %v1287
      %v1289 = vpop.f32.mrb[0].mxu0
      %v1290 = vpop.f32.mrb[0].mxu0
      %v1291 = vadd.f32 %v330, %v1290
      %v1292 = vpop.f32.mrb[0].mxu0
      %1293 = vmatprep.mubr.bf16.mxu0 %v1003
      %1294 = vmatmul.mubr.bf16.gmra.mrb[0].mxu0 %v740
      %v1295 = vpop.f32.mrb[0].mxu0
      %v1296 = vadd.f32 %v330, %v1295
      %v1297 = vpop.f32.mrb[0].mxu0
      %v1298 = vpop.f32.mrb[0].mxu0
      %v1299 = vadd.f32 %v330, %v1298
      %v1300 = vpop.f32.mrb[0].mxu0
      %1301 = vmatprep.mubr.bf16.mxu0 %v1006
      %1302 = vmatmul.mubr.bf16.gmra.mrb[0].mxu0 %v742
      %v1303 = vpop.f32.mrb[0].mxu0
      %v1304 = vadd.f32 %v330, %v1303
      %v1305 = vpop.f32.mrb[0].mxu0
      %v1306 = vpop.f32.mrb[0].mxu0
      %v1307 = vadd.f32 %v330, %v1306
      %v1308 = vpop.f32.mrb[0].mxu0
      %1309 = vmatprep.mubr.bf16.mxu0 %v1009
      %1310 = vmatmul.mubr.bf16.gmra.mrb[0].mxu0 %v744
      %v1311 = vpop.f32.mrb[0].mxu0
      %v1312 = vadd.f32 %v330, %v1311
      %v1313 = vpop.f32.mrb[0].mxu0
      %v1314 = vpop.f32.mrb[0].mxu0
      %v1315 = vadd.f32 %v330, %v1314
      %v1316 = vpop.f32.mrb[0].mxu0
      %1317 = vmatprep.mubr.bf16.mxu0 %v1012
      %1318 = vmatmul.mubr.bf16.gmra.mrb[0].mxu0 %v746
      %v1319 = vpop.f32.mrb[0].mxu0
      %v1320 = vadd.f32 %v330, %v1319
      %v1321 = vpop.f32.mrb[0].mxu0
      %v1322 = vpop.f32.mrb[0].mxu0
      %v1323 = vadd.f32 %v330, %v1322
      %v1324 = vpop.f32.mrb[0].mxu0
      %1325 = vmatprep.mubr.bf16.mxu0 %v1015
      %1326 = vmatmul.mubr.bf16.gmra.mrb[0].mxu0 %v748
      %v1327 = vpop.f32.mrb[0].mxu0
      %v1328 = vadd.f32 %v330, %v1327
      %v1329 = vpop.f32.mrb[0].mxu0
      %v1330 = vpop.f32.mrb[0].mxu0
      %v1331 = vadd.f32 %v330, %v1330
      %v1332 = vpop.f32.mrb[0].mxu0
      %1333 = vmatprep.mubr.bf16.mxu0 %v1018
      %1334 = vmatmul.mubr.bf16.gmra.mrb[0].mxu0 %v750
      %v1335 = vpop.f32.mrb[0].mxu0
      %v1336 = vadd.f32 %v330, %v1335
      %v1337 = vpop.f32.mrb[0].mxu0
      %v1338 = vpop.f32.mrb[0].mxu0
      %v1339 = vadd.f32 %v330, %v1338
      %v1340 = vpop.f32.mrb[0].mxu0
      %1341 = vmatprep.mubr.bf16.mxu0 %v1021
      %1342 = vmatmul.mubr.bf16.gmra.mrb[0].mxu0 %v752
      %v1343 = vpop.f32.mrb[0].mxu0
      %v1344 = vadd.f32 %v330, %v1343
      %v1345 = vpop.f32.mrb[0].mxu0
      %v1346 = vpop.f32.mrb[0].mxu0
      %v1347 = vadd.f32 %v330, %v1346
      %v1348 = vpop.f32.mrb[0].mxu0
      %1349 = vmatprep.mubr.bf16.mxu0 %v1024
      %1350 = vmatmul.mubr.bf16.gmra.mrb[0].mxu0 %v754
      %v1351 = vpop.f32.mrb[0].mxu0
      %v1352 = vadd.f32 %v330, %v1351
      %v1353 = vpop.f32.mrb[0].mxu0
      %v1354 = vpop.f32.mrb[0].mxu0
      %v1355 = vadd.f32 %v330, %v1354
      %v1356 = vpop.f32.mrb[0].mxu0
      %1357 = vmatprep.mubr.bf16.mxu0 %v1027
      %1358 = vmatmul.mubr.bf16.gmra.mrb[0].mxu0 %v756
      %v1359 = vpop.f32.mrb[0].mxu0
      %v1360 = vadd.f32 %v330, %v1359
      %v1361 = vpop.f32.mrb[0].mxu0
      %v1362 = vpop.f32.mrb[0].mxu0
      %v1363 = vadd.f32 %v330, %v1362
      %v1364 = vpop.f32.mrb[0].mxu0
      %1365 = vmatprep.mubr.bf16.mxu0 %v1030
      %1366 = vmatmul.mubr.bf16.gmra.mrb[0].mxu0 %v758
      %v1367 = vpop.f32.mrb[0].mxu0
      %v1368 = vadd.f32 %v330, %v1367
      %v1369 = vpop.f32.mrb[0].mxu0
      %v1370 = vpop.f32.mrb[0].mxu0
      %v1371 = vadd.f32 %v330, %v1370
      %v1372 = vpop.f32.mrb[0].mxu0
      %1373 = vmatprep.mubr.bf16.mxu0 %v1033
      %1374 = vmatmul.mubr.bf16.gmra.mrb[0].mxu0 %v760
      %v1375 = vpop.f32.mrb[0].mxu0
      %v1376 = vadd.f32 %v330, %v1375
      %v1377 = vpop.f32.mrb[0].mxu0
      %v1378 = vpop.f32.mrb[0].mxu0
      %v1379 = vadd.f32 %v330, %v1378
      %v1380 = vpop.f32.mrb[0].mxu0
      %1381 = vmatprep.mubr.bf16.mxu0 %v1036
      %1382 = vmatmul.mubr.bf16.gmra.mrb[0].mxu0 %v762
      %v1383 = vpop.f32.mrb[0].mxu0
      %v1384 = vadd.f32 %v330, %v1383
      %v1385 = vpop.f32.mrb[0].mxu0
      %v1386 = vpop.f32.mrb[0].mxu0
      %v1387 = vadd.f32 %v330, %v1386
      %v1388 = vpop.f32.mrb[0].mxu0
      %1389 = vmatprep.mubr.bf16.mxu0 %v1039
      %1390 = vmatmul.mubr.bf16.gmra.mrb[0].mxu0 %v764
      %v1391 = vpop.f32.mrb[0].mxu0
      %v1392 = vadd.f32 %v330, %v1391
      %v1393 = vpop.f32.mrb[0].mxu0
      %v1394 = vpop.f32.mrb[0].mxu0
      %v1395 = vadd.f32 %v330, %v1394
      %v1396 = vpop.f32.mrb[0].mxu0
      %1397 = vmatprep.mubr.bf16.mxu0 %v1042
      %1398 = vmatmul.mubr.bf16.gmra.mrb[0].mxu0 %v766
      %v1399 = vpop.f32.mrb[0].mxu0
      %v1400 = vadd.f32 %v330, %v1399
      %v1401 = vpop.f32.mrb[0].mxu0
      %v1402 = vpop.f32.mrb[0].mxu0
      %v1403 = vadd.f32 %v330, %v1402
      %v1404 = vpop.f32.mrb[0].mxu0
      %1405 = vmatprep.mubr.bf16.mxu0 %v1045
      %1406 = vmatmul.mubr.bf16.gmra.mrb[0].mxu0 %v768
      %v1407 = vpop.f32.mrb[0].mxu0
      %v1408 = vadd.f32 %v330, %v1407
      %v1409 = vpop.f32.mrb[0].mxu0
      %v1410 = vpop.f32.mrb[0].mxu0
      %v1411 = vadd.f32 %v330, %v1410
      %v1412 = vpop.f32.mrb[0].mxu0
      %1413 = vmatprep.mubr.bf16.mxu0 %v1048
      %1414 = vmatmul.mubr.bf16.gmra.mrb[0].mxu0 %v770
      %v1415 = vpop.f32.mrb[0].mxu0
      %v1416 = vadd.f32 %v330, %v1415
      %v1417 = vpop.f32.mrb[0].mxu0
      %v1418 = vpop.f32.mrb[0].mxu0
      %v1419 = vadd.f32 %v330, %v1418
      %v1420 = vpop.f32.mrb[0].mxu0
      %1421 = vmatprep.mubr.bf16.mxu0 %v1051
      %1422 = vmatmul.mubr.bf16.gmra.mrb[0].mxu0 %v772
      %v1423 = vpop.f32.mrb[0].mxu0
      %v1424 = vadd.f32 %v330, %v1423
      %v1425 = vpop.f32.mrb[0].mxu0
      %v1426 = vpop.f32.mrb[0].mxu0
      %v1427 = vadd.f32 %v330, %v1426
      %v1428 = vpop.f32.mrb[0].mxu0
      %1429 = vmatprep.mubr.bf16.mxu0 %v1054
      %1430 = vmatmul.mubr.bf16.gmra.mrb[0].mxu0 %v774
      %v1431 = vpop.f32.mrb[0].mxu0
      %v1432 = vadd.f32 %v330, %v1431
      %v1433 = vpop.f32.mrb[0].mxu0
      %v1434 = vpop.f32.mrb[0].mxu0
      %v1435 = vadd.f32 %v330, %v1434
      %v1436 = vpop.f32.mrb[0].mxu0
      %1437 = vmatprep.mubr.bf16.mxu0 %v1057
      %1438 = vmatmul.mubr.bf16.gmra.mrb[0].mxu0 %v776
      %v1439 = vpop.f32.mrb[0].mxu0
      %v1440 = vadd.f32 %v330, %v1439
      %v1441 = vpop.f32.mrb[0].mxu0
      %v1442 = vpop.f32.mrb[0].mxu0
      %v1443 = vadd.f32 %v330, %v1442
      %v1444 = vpop.f32.mrb[0].mxu0
      %1445 = vmatprep.mubr.bf16.mxu0 %v1060
      %1446 = vmatmul.mubr.bf16.gmra.mrb[0].mxu0 %v778
      %v1447 = vpop.f32.mrb[0].mxu0
      %v1448 = vadd.f32 %v330, %v1447
      %v1449 = vpop.f32.mrb[0].mxu0
      %v1450 = vpop.f32.mrb[0].mxu0
      %v1451 = vadd.f32 %v330, %v1450
      %v1452 = vpop.f32.mrb[0].mxu0
      %1453 = vmatprep.mubr.bf16.mxu0 %v1063
      %1454 = vmatmul.mubr.bf16.gmra.mrb[0].mxu0 %v780
      %v1455 = vpop.f32.mrb[0].mxu0
      %v1456 = vadd.f32 %v330, %v1455
      %v1457 = vpop.f32.mrb[0].mxu0
      %v1458 = vpop.f32.mrb[0].mxu0
      %v1459 = vadd.f32 %v330, %v1458
      %v1460 = vpop.f32.mrb[0].mxu0
      %1461 = vmatprep.mubr.bf16.mxu0 %v1066
      %1462 = vmatmul.mubr.bf16.gmra.mrb[0].mxu0 %v782
      %v1463 = vpop.f32.mrb[0].mxu0
      %v1464 = vadd.f32 %v330, %v1463
      %v1465 = vpop.f32.mrb[0].mxu0
      %v1466 = vpop.f32.mrb[0].mxu0
      %v1467 = vadd.f32 %v330, %v1466
      %v1468 = vpop.f32.mrb[0].mxu0
      %1469 = vmatprep.mubr.bf16.mxu0 %v1069
      %1470 = vmatmul.mubr.bf16.gmra.mrb[0].mxu0 %v784
      %v1471 = vpop.f32.mrb[0].mxu0
      %v1472 = vadd.f32 %v330, %v1471
      %v1473 = vpop.f32.mrb[0].mxu0
      %v1474 = vpop.f32.mrb[0].mxu0
      %v1475 = vadd.f32 %v330, %v1474
      %v1476 = vpop.f32.mrb[0].mxu0
      %1477 = vmatprep.mubr.bf16.mxu0 %v1072
      %1478 = vmatmul.mubr.bf16.gmra.mrb[0].mxu0 %v786
      %v1479 = vpop.f32.mrb[0].mxu0
      %v1480 = vadd.f32 %v330, %v1479
      %v1481 = vpop.f32.mrb[0].mxu0
      %v1482 = vpop.f32.mrb[0].mxu0
      %v1483 = vadd.f32 %v330, %v1482
      %v1484 = vpop.f32.mrb[0].mxu0
      %1485 = vmatprep.mubr.bf16.mxu0 %v1075
      %1486 = vmatmul.mubr.bf16.gmra.mrb[0].mxu0 %v788
      %v1487 = vpop.f32.mrb[0].mxu0
      %v1488 = vadd.f32 %v330, %v1487
      %v1489 = vpop.f32.mrb[0].mxu0
      %v1490 = vpop.f32.mrb[0].mxu0
      %v1491 = vadd.f32 %v330, %v1490
      %v1492 = vpop.f32.mrb[0].mxu0
      %1493 = vmatprep.mubr.bf16.mxu0 %v1078
      %1494 = vmatmul.mubr.bf16.gmra.mrb[0].mxu0 %v790
      %v1495 = vpop.f32.mrb[0].mxu0
      %v1496 = vadd.f32 %v330, %v1495
      %v1497 = vpop.f32.mrb[0].mxu0
      %v1498 = vpop.f32.mrb[0].mxu0
      %v1499 = vadd.f32 %v330, %v1498
      %v1500 = vpop.f32.mrb[0].mxu0
      %1501 = vmatprep.mubr.bf16.mxu0 %v1081
      %1502 = vmatmul.mubr.bf16.gmra.mrb[0].mxu0 %v792
      %v1503 = vpop.f32.mrb[0].mxu0
      %v1504 = vadd.f32 %v330, %v1503
      %v1505 = vpop.f32.mrb[0].mxu0
      %v1506 = vpop.f32.mrb[0].mxu0
      %v1507 = vadd.f32 %v330, %v1506
      %v1508 = vpop.f32.mrb[0].mxu0
      %1509 = vmatprep.mubr.bf16.mxu0 %v1084
      %1510 = vmatmul.mubr.bf16.gmra.mrb[0].mxu0 %v794
      %v1511 = vpop.f32.mrb[0].mxu0
      %v1512 = vadd.f32 %v330, %v1511
      %v1513 = vpop.f32.mrb[0].mxu0
      %v1514 = vpop.f32.mrb[0].mxu0
      %v1515 = vadd.f32 %v330, %v1514
      %v1516 = vpop.f32.mrb[0].mxu0
      %1517 = vmatprep.mubr.bf16.mxu0 %v1087
      %1518 = vmatmul.mubr.bf16.gmra.mrb[0].mxu0 %v796
      %v1519 = vpop.f32.mrb[0].mxu0
      %v1520 = vadd.f32 %v330, %v1519
      %v1521 = vpop.f32.mrb[0].mxu0
      %v1522 = vpop.f32.mrb[0].mxu0
      %v1523 = vadd.f32 %v330, %v1522
      %v1524 = vpop.f32.mrb[0].mxu0
      %1525 = vmatprep.mubr.bf16.mxu0 %v1090
      %1526 = vmatmul.mubr.bf16.gmra.mrb[0].mxu0 %v798
      %v1527 = vpop.f32.mrb[0].mxu0
      %v1528 = vadd.f32 %v330, %v1527
      %v1529 = vpop.f32.mrb[0].mxu0
      %v1530 = vpop.f32.mrb[0].mxu0
      %v1531 = vadd.f32 %v330, %v1530
      %v1532 = vpop.f32.mrb[0].mxu0
      %1533 = vmatprep.mubr.bf16.mxu0 %v1093
      %1534 = vmatmul.mubr.bf16.gmra.mrb[0].mxu0 %v800
      %v1535 = vpop.f32.mrb[0].mxu0
      %v1536 = vadd.f32 %v330, %v1535
      %v1537 = vpop.f32.mrb[0].mxu0
      %v1538 = vpop.f32.mrb[0].mxu0
      %v1539 = vadd.f32 %v330, %v1538
      %v1540 = vpop.f32.mrb[0].mxu0
      %1541 = vmatprep.mubr.bf16.mxu0 %v1096
      %1542 = vmatmul.mubr.bf16.gmra.mrb[0].mxu0 %v802
      %v1543 = vpop.f32.mrb[0].mxu0
      %v1544 = vadd.f32 %v330, %v1543
      %v1545 = vpop.f32.mrb[0].mxu0
      %v1546 = vpop.f32.mrb[0].mxu0
      %v1547 = vadd.f32 %v330, %v1546
      %v1548 = vpop.f32.mrb[0].mxu0
      %1549 = vmatprep.mubr.bf16.mxu0 %v1099
      %1550 = vmatmul.mubr.bf16.gmra.mrb[0].mxu0 %v804
      %v1551 = vpop.f32.mrb[0].mxu0
      %v1552 = vadd.f32 %v330, %v1551
      %v1553 = vpop.f32.mrb[0].mxu0
      %v1554 = vpop.f32.mrb[0].mxu0
      %v1555 = vadd.f32 %v330, %v1554
      %v1556 = vpop.f32.mrb[0].mxu0
      %1557 = vmatprep.mubr.bf16.mxu0 %v1102
      %1558 = vmatmul.mubr.bf16.gmra.mrb[0].mxu0 %v806
      %v1559 = vpop.f32.mrb[0].mxu0
      %v1560 = vadd.f32 %v330, %v1559
      %v1561 = vpop.f32.mrb[0].mxu0
      %v1562 = vpop.f32.mrb[0].mxu0
      %v1563 = vadd.f32 %v330, %v1562
      %v1564 = vpop.f32.mrb[0].mxu0
      %1565 = vmatprep.mubr.bf16.mxu0 %v1105
      %1566 = vmatmul.mubr.bf16.gmra.mrb[0].mxu0 %v808
      %v1567 = vpop.f32.mrb[0].mxu0
      %v1568 = vadd.f32 %v330, %v1567
      %v1569 = vpop.f32.mrb[0].mxu0
      %v1570 = vpop.f32.mrb[0].mxu0
      %v1571 = vadd.f32 %v330, %v1570
      %v1572 = vpop.f32.mrb[0].mxu0
      %1573 = vmatprep.mubr.bf16.mxu0 %v1108
      %1574 = vmatmul.mubr.bf16.gmra.mrb[0].mxu0 %v810
      %v1575 = vpop.f32.mrb[0].mxu0
      %v1576 = vadd.f32 %v330, %v1575
      %v1577 = vpop.f32.mrb[0].mxu0
      %v1578 = vpop.f32.mrb[0].mxu0
      %v1579 = vadd.f32 %v330, %v1578
      %v1580 = vpop.f32.mrb[0].mxu0
      %1581 = vmatprep.mubr.bf16.mxu0 %v1111
      %1582 = vmatmul.mubr.bf16.gmra.mrb[0].mxu0 %v812
      %v1583 = vpop.f32.mrb[0].mxu0
      %v1584 = vadd.f32 %v330, %v1583
      %v1585 = vpop.f32.mrb[0].mxu0
      %v1586 = vpop.f32.mrb[0].mxu0
      %v1587 = vadd.f32 %v330, %v1586
      %v1588 = vpop.f32.mrb[0].mxu0
      %1589 = vmatprep.mubr.bf16.mxu0 %v1114
      %1590 = vmatmul.mubr.bf16.gmra.mrb[0].mxu0 %v814
      %v1591 = vpop.f32.mrb[0].mxu0
      %v1592 = vadd.f32 %v330, %v1591
      %v1593 = vpop.f32.mrb[0].mxu0
      %v1594 = vpop.f32.mrb[0].mxu0
      %v1595 = vadd.f32 %v330, %v1594
      %v1596 = vpop.f32.mrb[0].mxu0
      %1597 = vmatprep.mubr.bf16.mxu0 %v1117
      %1598 = vmatmul.mubr.bf16.gmra.mrb[0].mxu0 %v816
      %v1599 = vpop.f32.mrb[0].mxu0
      %v1600 = vadd.f32 %v330, %v1599
      %v1601 = vpop.f32.mrb[0].mxu0
      %v1602 = vpop.f32.mrb[0].mxu0
      %v1603 = vadd.f32 %v330, %v1602
      %v1604 = vpop.f32.mrb[0].mxu0
      %1605 = vmatprep.mubr.bf16.mxu0 %v1120
      %1606 = vmatmul.mubr.bf16.gmra.mrb[0].mxu0 %v818
      %v1607 = vpop.f32.mrb[0].mxu0
      %v1608 = vadd.f32 %v330, %v1607
      %v1609 = vpop.f32.mrb[0].mxu0
      %v1610 = vpop.f32.mrb[0].mxu0
      %v1611 = vadd.f32 %v330, %v1610
      %v1612 = vpop.f32.mrb[0].mxu0
      %1613 = vmatprep.mubr.bf16.mxu0 %v1123
      %1614 = vmatmul.mubr.bf16.gmra.mrb[0].mxu0 %v820
      %v1615 = vpop.f32.mrb[0].mxu0
      %v1616 = vadd.f32 %v330, %v1615
      %v1617 = vpop.f32.mrb[0].mxu0
      %v1618 = vpop.f32.mrb[0].mxu0
      %v1619 = vadd.f32 %v330, %v1618
      %v1620 = vpop.f32.mrb[0].mxu0
      %1621 = vmatprep.mubr.bf16.mxu0 %v1126
      %1622 = vmatmul.mubr.bf16.gmra.mrb[0].mxu0 %v822
      %v1623 = vpop.f32.mrb[0].mxu0
      %v1624 = vadd.f32 %v330, %v1623
      %v1625 = vpop.f32.mrb[0].mxu0
      %v1626 = vpop.f32.mrb[0].mxu0
      %v1627 = vadd.f32 %v330, %v1626
      %v1628 = vpop.f32.mrb[0].mxu0
      %1629 = vmatprep.mubr.bf16.mxu0 %v1129
      %1630 = vmatmul.mubr.bf16.gmra.mrb[0].mxu0 %v824
      %v1631 = vpop.f32.mrb[0].mxu0
      %v1632 = vadd.f32 %v330, %v1631
      %v1633 = vpop.f32.mrb[0].mxu0
      %v1634 = vpop.f32.mrb[0].mxu0
      %v1635 = vadd.f32 %v330, %v1634
      %v1636 = vpop.f32.mrb[0].mxu0
      %1637 = vmatprep.mubr.bf16.mxu0 %v1132
      %1638 = vmatmul.mubr.bf16.gmra.mrb[0].mxu0 %v826
      %v1639 = vpop.f32.mrb[0].mxu0
      %v1640 = vadd.f32 %v330, %v1639
      %v1641 = vpop.f32.mrb[0].mxu0
      %v1642 = vpop.f32.mrb[0].mxu0
      %v1643 = vadd.f32 %v330, %v1642
      %v1644 = vpop.f32.mrb[0].mxu0
      %1645 = vmatprep.mubr.bf16.mxu0 %v1135
      %1646 = vmatmul.mubr.bf16.gmra.mrb[0].mxu0 %v828
      %v1647 = vpop.f32.mrb[0].mxu0
      %v1648 = vadd.f32 %v330, %v1647
      %v1649 = vpop.f32.mrb[0].mxu0
      %v1650 = vpop.f32.mrb[0].mxu0
      %v1651 = vadd.f32 %v330, %v1650
      %v1652 = vpop.f32.mrb[0].mxu0
      %1653 = vmatprep.mubr.bf16.mxu0 %v1138
      %1654 = vmatmul.mubr.bf16.gmra.mrb[0].mxu0 %v830
      %v1655 = vpop.f32.mrb[0].mxu0
      %v1656 = vadd.f32 %v330, %v1655
      %v1657 = vpop.f32.mrb[0].mxu0
      %v1658 = vpop.f32.mrb[0].mxu0
      %v1659 = vadd.f32 %v330, %v1658
      %v1660 = vpop.f32.mrb[0].mxu0
      %1661 = vmatprep.mubr.bf16.mxu0 %v1141
      %1662 = vmatmul.mubr.bf16.gmra.mrb[0].mxu0 %v832
      %v1663 = vpop.f32.mrb[0].mxu0
      %v1664 = vadd.f32 %v330, %v1663
      %v1665 = vpop.f32.mrb[0].mxu0
      %v1666 = vpop.f32.mrb[0].mxu0
      %v1667 = vadd.f32 %v330, %v1666
      %v1668 = vpop.f32.mrb[0].mxu0
      %1669 = vmatprep.mubr.bf16.mxu0 %v1144
      %1670 = vmatmul.mubr.bf16.gmra.mrb[0].mxu0 %v834
      %v1671 = vpop.f32.mrb[0].mxu0
      %v1672 = vadd.f32 %v330, %v1671
      %v1673 = vpop.f32.mrb[0].mxu0
      %v1674 = vpop.f32.mrb[0].mxu0
      %v1675 = vadd.f32 %v330, %v1674
      %v1676 = vpop.f32.mrb[0].mxu0
      %1677 = vmatprep.mubr.bf16.mxu0 %v1147
      %1678 = vmatmul.mubr.bf16.gmra.mrb[0].mxu0 %v836
      %v1679 = vpop.f32.mrb[0].mxu0
      %v1680 = vadd.f32 %v330, %v1679
      %v1681 = vpop.f32.mrb[0].mxu0
      %v1682 = vpop.f32.mrb[0].mxu0
      %v1683 = vadd.f32 %v330, %v1682
      %v1684 = vpop.f32.mrb[0].mxu0
      %1685 = vmatprep.mubr.bf16.mxu0 %v1150
      %1686 = vmatmul.mubr.bf16.gmra.mrb[0].mxu0 %v838
      %v1687 = vpop.f32.mrb[0].mxu0
      %v1688 = vadd.f32 %v330, %v1687
      %v1689 = vpop.f32.mrb[0].mxu0
      %v1690 = vpop.f32.mrb[0].mxu0
      %v1691 = vadd.f32 %v330, %v1690
      %v1692 = vpop.f32.mrb[0].mxu0
      %1693 = vmatprep.mubr.bf16.mxu0 %v1153
      %1694 = vmatmul.mubr.bf16.gmra.mrb[0].mxu0 %v840
      %v1695 = vpop.f32.mrb[0].mxu0
      %v1696 = vadd.f32 %v330, %v1695
      %v1697 = vpop.f32.mrb[0].mxu0
      %v1698 = vpop.f32.mrb[0].mxu0
      %v1699 = vadd.f32 %v330, %v1698
      %v1700 = vpop.f32.mrb[0].mxu0
      %1701 = vmatprep.mubr.bf16.mxu0 %v1156
      %1702 = vmatmul.mubr.bf16.gmra.mrb[0].mxu0 %v842
      %v1703 = vpop.f32.mrb[0].mxu0
      %v1704 = vadd.f32 %v330, %v1703
      %v1705 = vpop.f32.mrb[0].mxu0
      %v1706 = vpop.f32.mrb[0].mxu0
      %v1707 = vadd.f32 %v330, %v1706
      %v1708 = vpop.f32.mrb[0].mxu0
      %1709 = vdwg.mxu0
      %v1710 = vmax.f32 %v1200, 0.0
      %v1711 = vmax.f32 %v1203, 0.0
      %v1712 = vmax.f32 %v1208, 0.0
      %v1713 = vmax.f32 %v1211, 0.0
      %v1714 = vmax.f32 %v1216, 0.0
      %v1715 = vmax.f32 %v1219, 0.0
      %v1716 = vmax.f32 %v1224, 0.0
      %v1717 = vmax.f32 %v1227, 0.0
      %v1718 = vmax.f32 %v1232, 0.0
      %v1719 = vmax.f32 %v1235, 0.0
      %v1720 = vmax.f32 %v1240, 0.0
      %v1721 = vmax.f32 %v1243, 0.0
      %v1722 = vmax.f32 %v1248, 0.0
      %v1723 = vmax.f32 %v1251, 0.0
      %v1724 = vmax.f32 %v1256, 0.0
      %v1725 = vmax.f32 %v1259, 0.0
      %v1726 = vmax.f32 %v1264, 0.0
      %v1727 = vmax.f32 %v1267, 0.0
      %v1728 = vmax.f32 %v1272, 0.0
      %v1729 = vmax.f32 %v1275, 0.0
      %v1730 = vmax.f32 %v1280, 0.0
      %v1731 = vmax.f32 %v1283, 0.0
      %v1732 = vmax.f32 %v1288, 0.0
      %v1733 = vmax.f32 %v1291, 0.0
      %v1734 = vmax.f32 %v1296, 0.0
      %v1735 = vmax.f32 %v1299, 0.0
      %v1736 = vmax.f32 %v1304, 0.0
      %v1737 = vmax.f32 %v1307, 0.0
      %v1738 = vmax.f32 %v1312, 0.0
      %v1739 = vmax.f32 %v1315, 0.0
      %v1740 = vmax.f32 %v1320, 0.0
      %v1741 = vmax.f32 %v1323, 0.0
      %v1742 = vmax.f32 %v1328, 0.0
      %v1743 = vmax.f32 %v1331, 0.0
      %v1744 = vmax.f32 %v1336, 0.0
      %v1745 = vmax.f32 %v1339, 0.0
      %v1746 = vmax.f32 %v1344, 0.0
      %v1747 = vmax.f32 %v1347, 0.0
      %v1748 = vmax.f32 %v1352, 0.0
      %v1749 = vmax.f32 %v1355, 0.0
      %v1750 = vmax.f32 %v1360, 0.0
      %v1751 = vmax.f32 %v1363, 0.0
      %v1752 = vmax.f32 %v1368, 0.0
      %v1753 = vmax.f32 %v1371, 0.0
      %v1754 = vmax.f32 %v1376, 0.0
      %v1755 = vmax.f32 %v1379, 0.0
      %v1756 = vmax.f32 %v1384, 0.0
      %v1757 = vmax.f32 %v1387, 0.0
      %v1758 = vmax.f32 %v1392, 0.0
      %v1759 = vmax.f32 %v1395, 0.0
      %v1760 = vmax.f32 %v1400, 0.0
      %v1761 = vmax.f32 %v1403, 0.0
      %v1762 = vmax.f32 %v1408, 0.0
      %v1763 = vmax.f32 %v1411, 0.0
      %v1764 = vmax.f32 %v1416, 0.0
      %v1765 = vmax.f32 %v1419, 0.0
      %v1766 = vmax.f32 %v1424, 0.0
      %v1767 = vmax.f32 %v1427, 0.0
      %v1768 = vmax.f32 %v1432, 0.0
      %v1769 = vmax.f32 %v1435, 0.0
      %v1770 = vmax.f32 %v1440, 0.0
      %v1771 = vmax.f32 %v1443, 0.0
      %v1772 = vmax.f32 %v1448, 0.0
      %v1773 = vmax.f32 %v1451, 0.0
      %v1774 = vmax.f32 %v1456, 0.0
      %v1775 = vmax.f32 %v1459, 0.0
      %v1776 = vmax.f32 %v1464, 0.0
      %v1777 = vmax.f32 %v1467, 0.0
      %v1778 = vmax.f32 %v1472, 0.0
      %v1779 = vmax.f32 %v1475, 0.0
      %v1780 = vmax.f32 %v1480, 0.0
      %v1781 = vmax.f32 %v1483, 0.0
      %v1782 = vmax.f32 %v1488, 0.0
      %v1783 = vmax.f32 %v1491, 0.0
      %v1784 = vmax.f32 %v1496, 0.0
      %v1785 = vmax.f32 %v1499, 0.0
      %v1786 = vmax.f32 %v1504, 0.0
      %v1787 = vmax.f32 %v1507, 0.0
      %v1788 = vmax.f32 %v1512, 0.0
      %v1789 = vmax.f32 %v1515, 0.0
      %v1790 = vmax.f32 %v1520, 0.0
      %v1791 = vmax.f32 %v1523, 0.0
      %v1792 = vmax.f32 %v1528, 0.0
      %v1793 = vmax.f32 %v1531, 0.0
      %v1794 = vmax.f32 %v1536, 0.0
      %v1795 = vmax.f32 %v1539, 0.0
      %v1796 = vmax.f32 %v1544, 0.0
      %v1797 = vmax.f32 %v1547, 0.0
      %v1798 = vmax.f32 %v1552, 0.0
      %v1799 = vmax.f32 %v1555, 0.0
      %v1800 = vmax.f32 %v1560, 0.0
      %v1801 = vmax.f32 %v1563, 0.0
      %v1802 = vmax.f32 %v1568, 0.0
      %v1803 = vmax.f32 %v1571, 0.0
      %v1804 = vmax.f32 %v1576, 0.0
      %v1805 = vmax.f32 %v1579, 0.0
      %v1806 = vmax.f32 %v1584, 0.0
      %v1807 = vmax.f32 %v1587, 0.0
      %v1808 = vmax.f32 %v1592, 0.0
      %v1809 = vmax.f32 %v1595, 0.0
      %v1810 = vmax.f32 %v1600, 0.0
      %v1811 = vmax.f32 %v1603, 0.0
      %v1812 = vmax.f32 %v1608, 0.0
      %v1813 = vmax.f32 %v1611, 0.0
      %v1814 = vmax.f32 %v1616, 0.0
      %v1815 = vmax.f32 %v1619, 0.0
      %v1816 = vmax.f32 %v1624, 0.0
      %v1817 = vmax.f32 %v1627, 0.0
      %v1818 = vmax.f32 %v1632, 0.0
      %v1819 = vmax.f32 %v1635, 0.0
      %v1820 = vmax.f32 %v1640, 0.0
      %v1821 = vmax.f32 %v1643, 0.0
      %v1822 = vmax.f32 %v1648, 0.0
      %v1823 = vmax.f32 %v1651, 0.0
      %v1824 = vmax.f32 %v1656, 0.0
      %v1825 = vmax.f32 %v1659, 0.0
      %v1826 = vmax.f32 %v1664, 0.0
      %v1827 = vmax.f32 %v1667, 0.0
      %v1828 = vmax.f32 %v1672, 0.0
      %v1829 = vmax.f32 %v1675, 0.0
      %v1830 = vmax.f32 %v1680, 0.0
      %v1831 = vmax.f32 %v1683, 0.0
      %v1832 = vmax.f32 %v1688, 0.0
      %v1833 = vmax.f32 %v1691, 0.0
      %v1834 = vmax.f32 %v1696, 0.0
      %v1835 = vmax.f32 %v1699, 0.0
      %v1836 = vmax.f32 %v1704, 0.0
      %v1837 = vmax.f32 %v1707, 0.0
      %v1838 = vpack.c.bf16 %v1711, %v1710
      %v1839 = vpack.c.bf16 %v1713, %v1712
      %v1840 = vpack.c.bf16 %v1715, %v1714
      %v1841 = vpack.c.bf16 %v1717, %v1716
      %v1842 = vpack.c.bf16 %v1719, %v1718
      %v1843 = vpack.c.bf16 %v1721, %v1720
      %v1844 = vpack.c.bf16 %v1723, %v1722
      %v1845 = vpack.c.bf16 %v1725, %v1724
      %v1846 = vpack.c.bf16 %v1727, %v1726
      %v1847 = vpack.c.bf16 %v1729, %v1728
      %v1848 = vpack.c.bf16 %v1731, %v1730
      %v1849 = vpack.c.bf16 %v1733, %v1732
      %v1850 = vpack.c.bf16 %v1735, %v1734
      %v1851 = vpack.c.bf16 %v1737, %v1736
      %v1852 = vpack.c.bf16 %v1739, %v1738
      %v1853 = vpack.c.bf16 %v1741, %v1740
      %v1854 = vpack.c.bf16 %v1743, %v1742
      %v1855 = vpack.c.bf16 %v1745, %v1744
      %v1856 = vpack.c.bf16 %v1747, %v1746
      %v1857 = vpack.c.bf16 %v1749, %v1748
      %v1858 = vpack.c.bf16 %v1751, %v1750
      %v1859 = vpack.c.bf16 %v1753, %v1752
      %v1860 = vpack.c.bf16 %v1755, %v1754
      %v1861 = vpack.c.bf16 %v1757, %v1756
      %v1862 = vpack.c.bf16 %v1759, %v1758
      %v1863 = vpack.c.bf16 %v1761, %v1760
      %v1864 = vpack.c.bf16 %v1763, %v1762
      %v1865 = vpack.c.bf16 %v1765, %v1764
      %v1866 = vpack.c.bf16 %v1767, %v1766
      %v1867 = vpack.c.bf16 %v1769, %v1768
      %v1868 = vpack.c.bf16 %v1771, %v1770
      %v1869 = vpack.c.bf16 %v1773, %v1772
      %v1870 = vpack.c.bf16 %v1775, %v1774
      %v1871 = vpack.c.bf16 %v1777, %v1776
      %v1872 = vpack.c.bf16 %v1779, %v1778
      %v1873 = vpack.c.bf16 %v1781, %v1780
      %v1874 = vpack.c.bf16 %v1783, %v1782
      %v1875 = vpack.c.bf16 %v1785, %v1784
      %v1876 = vpack.c.bf16 %v1787, %v1786
      %v1877 = vpack.c.bf16 %v1789, %v1788
      %v1878 = vpack.c.bf16 %v1791, %v1790
      %v1879 = vpack.c.bf16 %v1793, %v1792
      %v1880 = vpack.c.bf16 %v1795, %v1794
      %v1881 = vpack.c.bf16 %v1797, %v1796
      %v1882 = vpack.c.bf16 %v1799, %v1798
      %v1883 = vpack.c.bf16 %v1801, %v1800
      %v1884 = vpack.c.bf16 %v1803, %v1802
      %v1885 = vpack.c.bf16 %v1805, %v1804
      %v1886 = vpack.c.bf16 %v1807, %v1806
      %v1887 = vpack.c.bf16 %v1809, %v1808
      %v1888 = vpack.c.bf16 %v1811, %v1810
      %v1889 = vpack.c.bf16 %v1813, %v1812
      %v1890 = vpack.c.bf16 %v1815, %v1814
      %v1891 = vpack.c.bf16 %v1817, %v1816
      %v1892 = vpack.c.bf16 %v1819, %v1818
      %v1893 = vpack.c.bf16 %v1821, %v1820
      %v1894 = vpack.c.bf16 %v1823, %v1822
      %v1895 = vpack.c.bf16 %v1825, %v1824
      %v1896 = vpack.c.bf16 %v1827, %v1826
      %v1897 = vpack.c.bf16 %v1829, %v1828
      %v1898 = vpack.c.bf16 %v1831, %v1830
      %v1899 = vpack.c.bf16 %v1833, %v1832
      %v1900 = vpack.c.bf16 %v1835, %v1834
      %v1901 = vpack.c.bf16 %v1837, %v1836
      %v1966 = vunpack.c.l.b16 %v1838
      %v1967 = vunpack.c.h.b16 %v1838
      %v1968 = vunpack.c.l.b16 %v1839
      %v1969 = vunpack.c.h.b16 %v1839
      %v1970 = vunpack.c.l.b16 %v1840
      %v1971 = vunpack.c.h.b16 %v1840
      %v1972 = vunpack.c.l.b16 %v1841
      %v1973 = vunpack.c.h.b16 %v1841
      %v1974 = vunpack.c.l.b16 %v1842
      %v1975 = vunpack.c.h.b16 %v1842
      %v1976 = vunpack.c.l.b16 %v1843
      %v1977 = vunpack.c.h.b16 %v1843
      %v1978 = vunpack.c.l.b16 %v1844
      %v1979 = vunpack.c.h.b16 %v1844
      %v1980 = vunpack.c.l.b16 %v1845
      %v1981 = vunpack.c.h.b16 %v1845
      %v1982 = vunpack.c.l.b16 %v1846
      %v1983 = vunpack.c.h.b16 %v1846
      %v1984 = vunpack.c.l.b16 %v1847
      %v1985 = vunpack.c.h.b16 %v1847
      %v1986 = vunpack.c.l.b16 %v1848
      %v1987 = vunpack.c.h.b16 %v1848
      %v1988 = vunpack.c.l.b16 %v1849
      %v1989 = vunpack.c.h.b16 %v1849
      %v1990 = vunpack.c.l.b16 %v1850
      %v1991 = vunpack.c.h.b16 %v1850
      %v1992 = vunpack.c.l.b16 %v1851
      %v1993 = vunpack.c.h.b16 %v1851
      %v1994 = vunpack.c.l.b16 %v1852
      %v1995 = vunpack.c.h.b16 %v1852
      %v1996 = vunpack.c.l.b16 %v1853
      %v1997 = vunpack.c.h.b16 %v1853
      %v1998 = vunpack.c.l.b16 %v1854
      %v1999 = vunpack.c.h.b16 %v1854
      %v2000 = vunpack.c.l.b16 %v1855
      %v2001 = vunpack.c.h.b16 %v1855
      %v2002 = vunpack.c.l.b16 %v1856
      %v2003 = vunpack.c.h.b16 %v1856
      %v2004 = vunpack.c.l.b16 %v1857
      %v2005 = vunpack.c.h.b16 %v1857
      %v2006 = vunpack.c.l.b16 %v1858
      %v2007 = vunpack.c.h.b16 %v1858
      %v2008 = vunpack.c.l.b16 %v1859
      %v2009 = vunpack.c.h.b16 %v1859
      %v2010 = vunpack.c.l.b16 %v1860
      %v2011 = vunpack.c.h.b16 %v1860
      %v2012 = vunpack.c.l.b16 %v1861
      %v2013 = vunpack.c.h.b16 %v1861
      %v2014 = vunpack.c.l.b16 %v1862
      %v2015 = vunpack.c.h.b16 %v1862
      %v2016 = vunpack.c.l.b16 %v1863
      %v2017 = vunpack.c.h.b16 %v1863
      %v2018 = vunpack.c.l.b16 %v1864
      %v2019 = vunpack.c.h.b16 %v1864
      %v2020 = vunpack.c.l.b16 %v1865
      %v2021 = vunpack.c.h.b16 %v1865
      %v2022 = vunpack.c.l.b16 %v1866
      %v2023 = vunpack.c.h.b16 %v1866
      %v2024 = vunpack.c.l.b16 %v1867
      %v2025 = vunpack.c.h.b16 %v1867
      %v2026 = vunpack.c.l.b16 %v1868
      %v2027 = vunpack.c.h.b16 %v1868
      %v2028 = vunpack.c.l.b16 %v1869
      %v2029 = vunpack.c.h.b16 %v1869
      %v2030 = vunpack.c.l.b16 %v1870
      %v2031 = vunpack.c.h.b16 %v1870
      %v2032 = vunpack.c.l.b16 %v1871
      %v2033 = vunpack.c.h.b16 %v1871
      %v2034 = vunpack.c.l.b16 %v1872
      %v2035 = vunpack.c.h.b16 %v1872
      %v2036 = vunpack.c.l.b16 %v1873
      %v2037 = vunpack.c.h.b16 %v1873
      %v2038 = vunpack.c.l.b16 %v1874
      %v2039 = vunpack.c.h.b16 %v1874
      %v2040 = vunpack.c.l.b16 %v1875
      %v2041 = vunpack.c.h.b16 %v1875
      %v2042 = vunpack.c.l.b16 %v1876
      %v2043 = vunpack.c.h.b16 %v1876
      %v2044 = vunpack.c.l.b16 %v1877
      %v2045 = vunpack.c.h.b16 %v1877
      %v2046 = vunpack.c.l.b16 %v1878
      %v2047 = vunpack.c.h.b16 %v1878
      %v2048 = vunpack.c.l.b16 %v1879
      %v2049 = vunpack.c.h.b16 %v1879
      %v2050 = vunpack.c.l.b16 %v1880
      %v2051 = vunpack.c.h.b16 %v1880
      %v2052 = vunpack.c.l.b16 %v1881
      %v2053 = vunpack.c.h.b16 %v1881
      %v2054 = vunpack.c.l.b16 %v1882
      %v2055 = vunpack.c.h.b16 %v1882
      %v2056 = vunpack.c.l.b16 %v1883
      %v2057 = vunpack.c.h.b16 %v1883
      %v2058 = vunpack.c.l.b16 %v1884
      %v2059 = vunpack.c.h.b16 %v1884
      %v2060 = vunpack.c.l.b16 %v1885
      %v2061 = vunpack.c.h.b16 %v1885
      %v2062 = vunpack.c.l.b16 %v1886
      %v2063 = vunpack.c.h.b16 %v1886
      %v2064 = vunpack.c.l.b16 %v1887
      %v2065 = vunpack.c.h.b16 %v1887
      %v2066 = vunpack.c.l.b16 %v1888
      %v2067 = vunpack.c.h.b16 %v1888
      %v2068 = vunpack.c.l.b16 %v1889
      %v2069 = vunpack.c.h.b16 %v1889
      %v2070 = vunpack.c.l.b16 %v1890
      %v2071 = vunpack.c.h.b16 %v1890
      %v2072 = vunpack.c.l.b16 %v1891
      %v2073 = vunpack.c.h.b16 %v1891
      %v2074 = vunpack.c.l.b16 %v1892
      %v2075 = vunpack.c.h.b16 %v1892
      %v2076 = vunpack.c.l.b16 %v1893
      %v2077 = vunpack.c.h.b16 %v1893
      %v2078 = vunpack.c.l.b16 %v1894
      %v2079 = vunpack.c.h.b16 %v1894
      %v2080 = vunpack.c.l.b16 %v1895
      %v2081 = vunpack.c.h.b16 %v1895
      %v2082 = vunpack.c.l.b16 %v1896
      %v2083 = vunpack.c.h.b16 %v1896
      %v2084 = vunpack.c.l.b16 %v1897
      %v2085 = vunpack.c.h.b16 %v1897
      %v2086 = vunpack.c.l.b16 %v1898
      %v2087 = vunpack.c.h.b16 %v1898
      %v2088 = vunpack.c.l.b16 %v1899
      %v2089 = vunpack.c.h.b16 %v1899
      %v2090 = vunpack.c.l.b16 %v1900
      %v2091 = vunpack.c.h.b16 %v1900
      %v2092 = vunpack.c.l.b16 %v1901
      %v2093 = vunpack.c.h.b16 %v1901
      %v2094 = vpack.c.b16 %v1966, %v1966
      %v2095 = vpack.c.b16 %v1967, %v1967
      %v2096 = vpack.c.b16 %v1968, %v1968
      %v2097 = vpack.c.b16 %v1969, %v1969
      %v2098 = vpack.c.b16 %v1970, %v1970
      %v2099 = vpack.c.b16 %v1971, %v1971
      %v2100 = vpack.c.b16 %v1972, %v1972
      %v2101 = vpack.c.b16 %v1973, %v1973
      %v2102 = vpack.c.b16 %v1974, %v1974
      %v2103 = vpack.c.b16 %v1975, %v1975
      %v2104 = vpack.c.b16 %v1976, %v1976
      %v2105 = vpack.c.b16 %v1977, %v1977
      %v2106 = vpack.c.b16 %v1978, %v1978
      %v2107 = vpack.c.b16 %v1979, %v1979
      %v2108 = vpack.c.b16 %v1980, %v1980
      %v2109 = vpack.c.b16 %v1981, %v1981
      %v2110 = vpack.c.b16 %v1982, %v1982
      %v2111 = vpack.c.b16 %v1983, %v1983
      %v2112 = vpack.c.b16 %v1984, %v1984
      %v2113 = vpack.c.b16 %v1985, %v1985
      %v2114 = vpack.c.b16 %v1986, %v1986
      %v2115 = vpack.c.b16 %v1987, %v1987
      %v2116 = vpack.c.b16 %v1988, %v1988
      %v2117 = vpack.c.b16 %v1989, %v1989
      %v2118 = vpack.c.b16 %v1990, %v1990
      %v2119 = vpack.c.b16 %v1991, %v1991
      %v2120 = vpack.c.b16 %v1992, %v1992
      %v2121 = vpack.c.b16 %v1993, %v1993
      %v2122 = vpack.c.b16 %v1994, %v1994
      %v2123 = vpack.c.b16 %v1995, %v1995
      %v2124 = vpack.c.b16 %v1996, %v1996
      %v2125 = vpack.c.b16 %v1997, %v1997
      %v2126 = vpack.c.b16 %v1998, %v1998
      %v2127 = vpack.c.b16 %v1999, %v1999
      %v2128 = vpack.c.b16 %v2000, %v2000
      %v2129 = vpack.c.b16 %v2001, %v2001
      %v2130 = vpack.c.b16 %v2002, %v2002
      %v2131 = vpack.c.b16 %v2003, %v2003
      %v2132 = vpack.c.b16 %v2004, %v2004
      %v2133 = vpack.c.b16 %v2005, %v2005
      %v2134 = vpack.c.b16 %v2006, %v2006
      %v2135 = vpack.c.b16 %v2007, %v2007
      %v2136 = vpack.c.b16 %v2008, %v2008
      %v2137 = vpack.c.b16 %v2009, %v2009
      %v2138 = vpack.c.b16 %v2010, %v2010
      %v2139 = vpack.c.b16 %v2011, %v2011
      %v2140 = vpack.c.b16 %v2012, %v2012
      %v2141 = vpack.c.b16 %v2013, %v2013
      %v2142 = vpack.c.b16 %v2014, %v2014
      %v2143 = vpack.c.b16 %v2015, %v2015
      %v2144 = vpack.c.b16 %v2016, %v2016
      %v2145 = vpack.c.b16 %v2017, %v2017
      %v2146 = vpack.c.b16 %v2018, %v2018
      %v2147 = vpack.c.b16 %v2019, %v2019
      %v2148 = vpack.c.b16 %v2020, %v2020
      %v2149 = vpack.c.b16 %v2021, %v2021
      %v2150 = vpack.c.b16 %v2022, %v2022
      %v2151 = vpack.c.b16 %v2023, %v2023
      %v2152 = vpack.c.b16 %v2024, %v2024
      %v2153 = vpack.c.b16 %v2025, %v2025
      %v2154 = vpack.c.b16 %v2026, %v2026
      %v2155 = vpack.c.b16 %v2027, %v2027
      %v2156 = vpack.c.b16 %v2028, %v2028
      %v2157 = vpack.c.b16 %v2029, %v2029
      %v2158 = vpack.c.b16 %v2030, %v2030
      %v2159 = vpack.c.b16 %v2031, %v2031
      %v2160 = vpack.c.b16 %v2032, %v2032
      %v2161 = vpack.c.b16 %v2033, %v2033
      %v2162 = vpack.c.b16 %v2034, %v2034
      %v2163 = vpack.c.b16 %v2035, %v2035
      %v2164 = vpack.c.b16 %v2036, %v2036
      %v2165 = vpack.c.b16 %v2037, %v2037
      %v2166 = vpack.c.b16 %v2038, %v2038
      %v2167 = vpack.c.b16 %v2039, %v2039
      %v2168 = vpack.c.b16 %v2040, %v2040
      %v2169 = vpack.c.b16 %v2041, %v2041
      %v2170 = vpack.c.b16 %v2042, %v2042
      %v2171 = vpack.c.b16 %v2043, %v2043
      %v2172 = vpack.c.b16 %v2044, %v2044
      %v2173 = vpack.c.b16 %v2045, %v2045
      %v2174 = vpack.c.b16 %v2046, %v2046
      %v2175 = vpack.c.b16 %v2047, %v2047
      %v2176 = vpack.c.b16 %v2048, %v2048
      %v2177 = vpack.c.b16 %v2049, %v2049
      %v2178 = vpack.c.b16 %v2050, %v2050
      %v2179 = vpack.c.b16 %v2051, %v2051
      %v2180 = vpack.c.b16 %v2052, %v2052
      %v2181 = vpack.c.b16 %v2053, %v2053
      %v2182 = vpack.c.b16 %v2054, %v2054
      %v2183 = vpack.c.b16 %v2055, %v2055
      %v2184 = vpack.c.b16 %v2056, %v2056
      %v2185 = vpack.c.b16 %v2057, %v2057
      %v2186 = vpack.c.b16 %v2058, %v2058
      %v2187 = vpack.c.b16 %v2059, %v2059
      %v2188 = vpack.c.b16 %v2060, %v2060
      %v2189 = vpack.c.b16 %v2061, %v2061
      %v2190 = vpack.c.b16 %v2062, %v2062
      %v2191 = vpack.c.b16 %v2063, %v2063
      %v2192 = vpack.c.b16 %v2064, %v2064
      %v2193 = vpack.c.b16 %v2065, %v2065
      %v2194 = vpack.c.b16 %v2066, %v2066
      %v2195 = vpack.c.b16 %v2067, %v2067
      %v2196 = vpack.c.b16 %v2068, %v2068
      %v2197 = vpack.c.b16 %v2069, %v2069
      %v2198 = vpack.c.b16 %v2070, %v2070
      %v2199 = vpack.c.b16 %v2071, %v2071
      %v2200 = vpack.c.b16 %v2072, %v2072
      %v2201 = vpack.c.b16 %v2073, %v2073
      %v2202 = vpack.c.b16 %v2074, %v2074
      %v2203 = vpack.c.b16 %v2075, %v2075
      %v2204 = vpack.c.b16 %v2076, %v2076
      %v2205 = vpack.c.b16 %v2077, %v2077
      %v2206 = vpack.c.b16 %v2078, %v2078
      %v2207 = vpack.c.b16 %v2079, %v2079
      %v2208 = vpack.c.b16 %v2080, %v2080
      %v2209 = vpack.c.b16 %v2081, %v2081
      %v2210 = vpack.c.b16 %v2082, %v2082
      %v2211 = vpack.c.b16 %v2083, %v2083
      %v2212 = vpack.c.b16 %v2084, %v2084
      %v2213 = vpack.c.b16 %v2085, %v2085
      %v2214 = vpack.c.b16 %v2086, %v2086
      %v2215 = vpack.c.b16 %v2087, %v2087
      %v2216 = vpack.c.b16 %v2088, %v2088
      %v2217 = vpack.c.b16 %v2089, %v2089
      %v2218 = vpack.c.b16 %v2090, %v2090
      %v2219 = vpack.c.b16 %v2091, %v2091
      %v2220 = vpack.c.b16 %v2092, %v2092
      %v2221 = vpack.c.b16 %v2093, %v2093
      %vm2350 = vcmask 519168
      %2351 = vst.msk [vmem:[%s175] sm:$0xf] %vm2350, %v2094
      %2352 = vst.msk [vmem:[%s175 + $0x4] sm:$0xf] %vm2350, %v2095
      %2353 = vst.msk [vmem:[%s175 + $0x8] sm:$0xf] %vm2350, %v2096
      %2354 = vst.msk [vmem:[%s175 + $0xc] sm:$0xf] %vm2350, %v2097
      %2355 = vst.msk [vmem:[%s175 + $0x10] sm:$0xf] %vm2350, %v2098
      %2356 = vst.msk [vmem:[%s175 + $0x14] sm:$0xf] %vm2350, %v2099
      %2357 = vst.msk [vmem:[%s175 + $0x18] sm:$0xf] %vm2350, %v2100
      %2358 = vst.msk [vmem:[%s175 + $0x1c] sm:$0xf] %vm2350, %v2101
      %2359 = vst.msk [vmem:[%s175 + $0x20] sm:$0xf] %vm2350, %v2102
      %2360 = vst.msk [vmem:[%s175 + $0x24] sm:$0xf] %vm2350, %v2103
      %2361 = vst.msk [vmem:[%s175 + $0x28] sm:$0xf] %vm2350, %v2104
      %2362 = vst.msk [vmem:[%s175 + $0x2c] sm:$0xf] %vm2350, %v2105
      %2363 = vst.msk [vmem:[%s175 + $0x30] sm:$0xf] %vm2350, %v2106
      %2364 = vst.msk [vmem:[%s175 + $0x34] sm:$0xf] %vm2350, %v2107
      %2365 = vst.msk [vmem:[%s175 + $0x38] sm:$0xf] %vm2350, %v2108
      %2366 = vst.msk [vmem:[%s175 + $0x3c] sm:$0xf] %vm2350, %v2109
      %2367 = vst.msk [vmem:[%s175 + $0x40] sm:$0xf] %vm2350, %v2110
      %2368 = vst.msk [vmem:[%s175 + $0x44] sm:$0xf] %vm2350, %v2111
      %2369 = vst.msk [vmem:[%s175 + $0x48] sm:$0xf] %vm2350, %v2112
      %2370 = vst.msk [vmem:[%s175 + $0x4c] sm:$0xf] %vm2350, %v2113
      %2371 = vst.msk [vmem:[%s175 + $0x50] sm:$0xf] %vm2350, %v2114
      %2372 = vst.msk [vmem:[%s175 + $0x54] sm:$0xf] %vm2350, %v2115
      %2373 = vst.msk [vmem:[%s175 + $0x58] sm:$0xf] %vm2350, %v2116
      %2374 = vst.msk [vmem:[%s175 + $0x5c] sm:$0xf] %vm2350, %v2117
      %2375 = vst.msk [vmem:[%s175 + $0x60] sm:$0xf] %vm2350, %v2118
      %2376 = vst.msk [vmem:[%s175 + $0x64] sm:$0xf] %vm2350, %v2119
      %2377 = vst.msk [vmem:[%s175 + $0x68] sm:$0xf] %vm2350, %v2120
      %2378 = vst.msk [vmem:[%s175 + $0x6c] sm:$0xf] %vm2350, %v2121
      %2379 = vst.msk [vmem:[%s175 + $0x70] sm:$0xf] %vm2350, %v2122
      %2380 = vst.msk [vmem:[%s175 + $0x74] sm:$0xf] %vm2350, %v2123
      %2381 = vst.msk [vmem:[%s175 + $0x78] sm:$0xf] %vm2350, %v2124
      %2382 = vst.msk [vmem:[%s175 + $0x7c] sm:$0xf] %vm2350, %v2125
      %2383 = vst.msk [vmem:[%s175 + $0x80] sm:$0xf] %vm2350, %v2126
      %2384 = vst.msk [vmem:[%s175 + $0x84] sm:$0xf] %vm2350, %v2127
      %2385 = vst.msk [vmem:[%s175 + $0x88] sm:$0xf] %vm2350, %v2128
      %2386 = vst.msk [vmem:[%s175 + $0x8c] sm:$0xf] %vm2350, %v2129
      %2387 = vst.msk [vmem:[%s175 + $0x90] sm:$0xf] %vm2350, %v2130
      %2388 = vst.msk [vmem:[%s175 + $0x94] sm:$0xf] %vm2350, %v2131
      %2389 = vst.msk [vmem:[%s175 + $0x98] sm:$0xf] %vm2350, %v2132
      %2390 = vst.msk [vmem:[%s175 + $0x9c] sm:$0xf] %vm2350, %v2133
      %2391 = vst.msk [vmem:[%s175 + $0xa0] sm:$0xf] %vm2350, %v2134
      %2392 = vst.msk [vmem:[%s175 + $0xa4] sm:$0xf] %vm2350, %v2135
      %2393 = vst.msk [vmem:[%s175 + $0xa8] sm:$0xf] %vm2350, %v2136
      %2394 = vst.msk [vmem:[%s175 + $0xac] sm:$0xf] %vm2350, %v2137
      %2395 = vst.msk [vmem:[%s175 + $0xb0] sm:$0xf] %vm2350, %v2138
      %2396 = vst.msk [vmem:[%s175 + $0xb4] sm:$0xf] %vm2350, %v2139
      %2397 = vst.msk [vmem:[%s175 + $0xb8] sm:$0xf] %vm2350, %v2140
      %2398 = vst.msk [vmem:[%s175 + $0xbc] sm:$0xf] %vm2350, %v2141
      %2399 = vst.msk [vmem:[%s175 + $0xc0] sm:$0xf] %vm2350, %v2142
      %2400 = vst.msk [vmem:[%s175 + $0xc4] sm:$0xf] %vm2350, %v2143
      %2401 = vst.msk [vmem:[%s175 + $0xc8] sm:$0xf] %vm2350, %v2144
      %2402 = vst.msk [vmem:[%s175 + $0xcc] sm:$0xf] %vm2350, %v2145
      %2403 = vst.msk [vmem:[%s175 + $0xd0] sm:$0xf] %vm2350, %v2146
      %2404 = vst.msk [vmem:[%s175 + $0xd4] sm:$0xf] %vm2350, %v2147
      %2405 = vst.msk [vmem:[%s175 + $0xd8] sm:$0xf] %vm2350, %v2148
      %2406 = vst.msk [vmem:[%s175 + $0xdc] sm:$0xf] %vm2350, %v2149
      %2407 = vst.msk [vmem:[%s175 + $0xe0] sm:$0xf] %vm2350, %v2150
      %2408 = vst.msk [vmem:[%s175 + $0xe4] sm:$0xf] %vm2350, %v2151
      %2409 = vst.msk [vmem:[%s175 + $0xe8] sm:$0xf] %vm2350, %v2152
      %2410 = vst.msk [vmem:[%s175 + $0xec] sm:$0xf] %vm2350, %v2153
      %2411 = vst.msk [vmem:[%s175 + $0xf0] sm:$0xf] %vm2350, %v2154
      %2412 = vst.msk [vmem:[%s175 + $0xf4] sm:$0xf] %vm2350, %v2155
      %2413 = vst.msk [vmem:[%s175 + $0xf8] sm:$0xf] %vm2350, %v2156
      %2414 = vst.msk [vmem:[%s175 + $0xfc] sm:$0xf] %vm2350, %v2157
      %2415 = vst.msk [vmem:[%s175 + $0x100] sm:$0xf] %vm2350, %v2158
      %2416 = vst.msk [vmem:[%s175 + $0x104] sm:$0xf] %vm2350, %v2159
      %2417 = vst.msk [vmem:[%s175 + $0x108] sm:$0xf] %vm2350, %v2160
      %2418 = vst.msk [vmem:[%s175 + $0x10c] sm:$0xf] %vm2350, %v2161
      %2419 = vst.msk [vmem:[%s175 + $0x110] sm:$0xf] %vm2350, %v2162
      %2420 = vst.msk [vmem:[%s175 + $0x114] sm:$0xf] %vm2350, %v2163
      %2421 = vst.msk [vmem:[%s175 + $0x118] sm:$0xf] %vm2350, %v2164
      %2422 = vst.msk [vmem:[%s175 + $0x11c] sm:$0xf] %vm2350, %v2165
      %2423 = vst.msk [vmem:[%s175 + $0x120] sm:$0xf] %vm2350, %v2166
      %2424 = vst.msk [vmem:[%s175 + $0x124] sm:$0xf] %vm2350, %v2167
      %2425 = vst.msk [vmem:[%s175 + $0x128] sm:$0xf] %vm2350, %v2168
      %2426 = vst.msk [vmem:[%s175 + $0x12c] sm:$0xf] %vm2350, %v2169
      %2427 = vst.msk [vmem:[%s175 + $0x130] sm:$0xf] %vm2350, %v2170
      %2428 = vst.msk [vmem:[%s175 + $0x134] sm:$0xf] %vm2350, %v2171
      %2429 = vst.msk [vmem:[%s175 + $0x138] sm:$0xf] %vm2350, %v2172
      %2430 = vst.msk [vmem:[%s175 + $0x13c] sm:$0xf] %vm2350, %v2173
      %2431 = vst.msk [vmem:[%s175 + $0x140] sm:$0xf] %vm2350, %v2174
      %2432 = vst.msk [vmem:[%s175 + $0x144] sm:$0xf] %vm2350, %v2175
      %2433 = vst.msk [vmem:[%s175 + $0x148] sm:$0xf] %vm2350, %v2176
      %2434 = vst.msk [vmem:[%s175 + $0x14c] sm:$0xf] %vm2350, %v2177
      %2435 = vst.msk [vmem:[%s175 + $0x150] sm:$0xf] %vm2350, %v2178
      %2436 = vst.msk [vmem:[%s175 + $0x154] sm:$0xf] %vm2350, %v2179
      %2437 = vst.msk [vmem:[%s175 + $0x158] sm:$0xf] %vm2350, %v2180
      %2438 = vst.msk [vmem:[%s175 + $0x15c] sm:$0xf] %vm2350, %v2181
      %2439 = vst.msk [vmem:[%s175 + $0x160] sm:$0xf] %vm2350, %v2182
      %2440 = vst.msk [vmem:[%s175 + $0x164] sm:$0xf] %vm2350, %v2183
      %2441 = vst.msk [vmem:[%s175 + $0x168] sm:$0xf] %vm2350, %v2184
      %2442 = vst.msk [vmem:[%s175 + $0x16c] sm:$0xf] %vm2350, %v2185
      %2443 = vst.msk [vmem:[%s175 + $0x170] sm:$0xf] %vm2350, %v2186
      %2444 = vst.msk [vmem:[%s175 + $0x174] sm:$0xf] %vm2350, %v2187
      %2445 = vst.msk [vmem:[%s175 + $0x178] sm:$0xf] %vm2350, %v2188
      %2446 = vst.msk [vmem:[%s175 + $0x17c] sm:$0xf] %vm2350, %v2189
      %2447 = vst.msk [vmem:[%s175 + $0x180] sm:$0xf] %vm2350, %v2190
      %2448 = vst.msk [vmem:[%s175 + $0x184] sm:$0xf] %vm2350, %v2191
      %2449 = vst.msk [vmem:[%s175 + $0x188] sm:$0xf] %vm2350, %v2192
      %2450 = vst.msk [vmem:[%s175 + $0x18c] sm:$0xf] %vm2350, %v2193
      %2451 = vst.msk [vmem:[%s175 + $0x190] sm:$0xf] %vm2350, %v2194
      %2452 = vst.msk [vmem:[%s175 + $0x194] sm:$0xf] %vm2350, %v2195
      %2453 = vst.msk [vmem:[%s175 + $0x198] sm:$0xf] %vm2350, %v2196
      %2454 = vst.msk [vmem:[%s175 + $0x19c] sm:$0xf] %vm2350, %v2197
      %2455 = vst.msk [vmem:[%s175 + $0x1a0] sm:$0xf] %vm2350, %v2198
      %2456 = vst.msk [vmem:[%s175 + $0x1a4] sm:$0xf] %vm2350, %v2199
      %2457 = vst.msk [vmem:[%s175 + $0x1a8] sm:$0xf] %vm2350, %v2200
      %2458 = vst.msk [vmem:[%s175 + $0x1ac] sm:$0xf] %vm2350, %v2201
      %2459 = vst.msk [vmem:[%s175 + $0x1b0] sm:$0xf] %vm2350, %v2202
      %2460 = vst.msk [vmem:[%s175 + $0x1b4] sm:$0xf] %vm2350, %v2203
      %2461 = vst.msk [vmem:[%s175 + $0x1b8] sm:$0xf] %vm2350, %v2204
      %2462 = vst.msk [vmem:[%s175 + $0x1bc] sm:$0xf] %vm2350, %v2205
      %2463 = vst.msk [vmem:[%s175 + $0x1c0] sm:$0xf] %vm2350, %v2206
      %2464 = vst.msk [vmem:[%s175 + $0x1c4] sm:$0xf] %vm2350, %v2207
      %2465 = vst.msk [vmem:[%s175 + $0x1c8] sm:$0xf] %vm2350, %v2208
      %2466 = vst.msk [vmem:[%s175 + $0x1cc] sm:$0xf] %vm2350, %v2209
      %2467 = vst.msk [vmem:[%s175 + $0x1d0] sm:$0xf] %vm2350, %v2210
      %2468 = vst.msk [vmem:[%s175 + $0x1d4] sm:$0xf] %vm2350, %v2211
      %2469 = vst.msk [vmem:[%s175 + $0x1d8] sm:$0xf] %vm2350, %v2212
      %2470 = vst.msk [vmem:[%s175 + $0x1dc] sm:$0xf] %vm2350, %v2213
      %2471 = vst.msk [vmem:[%s175 + $0x1e0] sm:$0xf] %vm2350, %v2214
      %2472 = vst.msk [vmem:[%s175 + $0x1e4] sm:$0xf] %vm2350, %v2215
      %2473 = vst.msk [vmem:[%s175 + $0x1e8] sm:$0xf] %vm2350, %v2216
      %2474 = vst.msk [vmem:[%s175 + $0x1ec] sm:$0xf] %vm2350, %v2217
      %2475 = vst.msk [vmem:[%s175 + $0x1f0] sm:$0xf] %vm2350, %v2218
      %2476 = vst.msk [vmem:[%s175 + $0x1f4] sm:$0xf] %vm2350, %v2219
      %2477 = vst.msk [vmem:[%s175 + $0x1f8] sm:$0xf] %vm2350, %v2220
      %2478 = vst.msk [vmem:[%s175 + $0x1fc] sm:$0xf] %vm2350, %v2221
      %s2479 = smul.u32 128, %s14
      %p2480 = scmp.lt.s32.totalorder %s2479, 3199
      %s2481 = scalar_select %p2480, %s2479, 3199
      %s2482 = smul.addr %s2481, 4
      %s2483 = scalar_lea.vmem %s3, %s2482
      // Predicated region
      $region33: #{pallas_linear.1} parent=31 // pred_check
        %p2484 = pneg %p100
      $region34: #{pallas_linear.1} parent=31 // pred_check_branch
        %2486 = sbr.rel (%p2484) target = $region36
      $region35: #{pallas_linear.1} parent=31 // pred_region
        %s2487 = smul.u32 128, %s14
      $region36: #{pallas_linear.1} parent=31 // pred_fallthru
        _
    $region32: #{pallas_linear.1} parent=5 // pred_fallthru
      _
    %p2488 = scmp.le.s32.totalorder 2, %s9
    // Predicated region
    $region37: #{pallas_linear.1} parent=5 // pred_check
      %p2489 = pneg %p2488
    $region38: #{pallas_linear.1} parent=5 // pred_check_branch
      %2491 = sbr.rel (%p2489) target = $region40
    $region39: #{pallas_linear.1} parent=5 // pred_region
      %s2492 = ssub.s32 %s9, 2
      // Predicated region
      $region41: #{pallas_linear.1} parent=39 // pred_check
        %p2493 = pneg %p106
      $region42: #{pallas_linear.1} parent=39 // pred_check_branch
        %2495 = sbr.rel (%p2493) target = $region44
      $region43: #{pallas_linear.1} parent=39 // pred_region
        %s2496 = smul.u32 128, %s15
        %p2497 = scmp.lt.s32.totalorder %s2496, 3199
        %s2498 = scalar_select %p2497, %s2496, 3199
        %s2499 = smul.addr %s2498, 4
        %s2500 = scalar_lea.vmem %s3, %s2499
      $region44: #{pallas_linear.1} parent=39 // pred_fallthru
        _
    $region40: #{pallas_linear.1} parent=5 // pred_fallthru
      _
  $region6: #{pallas_linear.1} parent=0 // loop_footer
    %s13 = sadd.s32 1, %s9
  $region7: #{pallas_linear.1} parent=0 // loop_footer_branch
    %8 = sbr.rel target = $region3
  $region8: #{pallas_linear.1} parent=0 // loop_exit
    _

</llo_original>
